<compile_context>
chip_gen: v7x
topology: tpu7x:2x2x1
jax: 0.10.0
libtpu: 0.0.40
codegen_flags: <defaults>
</compile_context>

<pallas_src>
import functools

import jax
import jax.numpy as jnp
from jax.experimental import pallas as pl
from jax.experimental.pallas import tpu as pltpu


def _round_up(n, m):
    return ((n + m - 1) // m) * m


# ----------------------------------------------------------------------------
# Packed-weight slab layout: every block starts at an 8-aligned row so all
# in-kernel slices are sublane-aligned (no relayout copies).
# ----------------------------------------------------------------------------
def _slab_layout(d_in, hidden, num_layers, n_static, fc_hidden=128):
    H = hidden
    cols = max(4 * H, fc_hidden)
    r = 0

    def take(n):
        nonlocal r
        off = r
        r += _round_up(n, 8)
        return off

    lstm = []
    for layer in range(num_layers):
        di = d_in if layer == 0 else H
        lstm.append({"wih": take(di), "d_in": di, "whh": take(H), "b": take(1)})
    fc = {"w1h": take(H), "w1s": take(n_static), "b1": take(1),
          "w2": take(1), "b2": take(1)}
    return {"lstm": lstm, "fc": fc, "rows": r, "cols": cols,
            "hidden": H, "fc_hidden": fc_hidden}


# ----------------------------------------------------------------------------
# Fused kernel: LSTM stack + MLP head, single grid step, everything in VMEM /
# vregs.  Weights come in as one packed slab, sliced with static offsets.
# ----------------------------------------------------------------------------
def _fused_lstm_mlp_kernel(x_ref, xs_ref, w_ref, out_ref, *,
                           layout, num_layers, hidden, seq_len, batch):
    H = hidden
    G = 4 * H
    T = seq_len
    B = batch
    FH = layout["fc_hidden"]

    # Layer-0 input: whole sequence, already time-major flattened to (T*B, D).
    layer_in = x_ref[...]

    h = None
    for l in range(num_layers):
        lo = layout["lstm"][l]
        di = lo["d_in"]
        wih = w_ref[lo["wih"]:lo["wih"] + di, :G]        # (d_in, 4H)
        whh = w_ref[lo["whh"]:lo["whh"] + H, :G]         # (H, 4H)
        bias = w_ref[lo["b"]:lo["b"] + 1, :G]            # (1, 4H)

        # Hoisted input projection for the whole sequence (one MXU matmul),
        # bias folded in; small enough to stay register-resident.
        proj = jnp.dot(layer_in, wih,
                       preferred_element_type=jnp.float32) + bias   # (T*B, 4H)

        h = jnp.zeros((B, H), jnp.float32)
        c = jnp.zeros((B, H), jnp.float32)
        hs = []
        # T is tiny -> fully static unroll with register-resident carries.
        # TODO(synk): for large T, cap the unroll and stage proj/hs via VMEM scratch.
        for t in range(T):
            gates = proj[t * B:(t + 1) * B, :] + jnp.dot(
                h, whh, preferred_element_type=jnp.float32)
            # Gate columns pre-permuted to (i, f, o, g) at pack time.
            sig = jax.nn.sigmoid(gates[:, :3 * H])       # i | f | o
            g_g = jnp.tanh(gates[:, 3 * H:])
            i_g = sig[:, :H]
            f_g = sig[:, H:2 * H]
            o_g = sig[:, 2 * H:3 * H]
            c = f_g * c + i_g * g_g
            h = o_g * jnp.tanh(c)
            if l < num_layers - 1:
                hs.append(h)
        if l < num_layers - 1:
            layer_in = jnp.concatenate(hs, axis=0)       # (T*B, H) next-layer input
        # TODO(synk): at larger B use a transposed (4H, B) gate layout (or
        #             pltpu.roll extraction) and hold W_hh stationary in the MXU.

    # ---- MLP head (Dropout = identity) ----
    fo = layout["fc"]
    S = xs_ref.shape[1]
    w1h = w_ref[fo["w1h"]:fo["w1h"] + H, :FH]            # (H, 128)
    w1s = w_ref[fo["w1s"]:fo["w1s"] + S, :FH]            # (S, 128)
    b1 = w_ref[fo["b1"]:fo["b1"] + 1, :FH]               # (1, 128)
    w2 = w_ref[fo["w2"]:fo["w2"] + 1, :FH]               # (1, 128)
    b2 = w_ref[fo["b2"]:fo["b2"] + 1, :FH]               # (1, 128) replicated

    # concat(h, x_static) @ W1  ==  h @ W1h + x_static @ W1s  (no concat needed)
    hid = (jnp.dot(h, w1h, preferred_element_type=jnp.float32)
           + jnp.dot(xs_ref[...], w1s, preferred_element_type=jnp.float32)
           + b1)
    hid = jnp.maximum(hid, 0.0)
    # Final (B,128)@(128,1) replaced by VPU multiply + XLU lane reduction.
    out = jnp.sum(hid * w2, axis=-1, keepdims=True) + b2[:, :1]
    out_ref[...] = out.astype(out_ref.dtype)


# ----------------------------------------------------------------------------
# Forward pass (matches LSTMClassifier_v2.forward, inference semantics).
# ----------------------------------------------------------------------------
@functools.partial(jax.jit, static_argnames=("num_layers", "hidden_size"))
def lstm_classifier_v2_forward(w_slab, x_temp, x_static, *, num_layers, hidden_size):
    B, T, D = x_temp.shape
    S = x_static.shape[1]
    H = hidden_size
    B_pad = _round_up(B, 8)                              # sublane-dense batch

    layout = _slab_layout(D, H, num_layers, S)
    assert w_slab.shape == (layout["rows"], layout["cols"]), w_slab.shape

    # One-time tiny layout prep (time-major + batch pad + flatten) in XLA.
    x = jnp.transpose(x_temp.astype(jnp.float32), (1, 0, 2))       # (T, B, D)
    xs = x_static.astype(jnp.float32)
    if B_pad != B:
        x = jnp.pad(x, ((0, 0), (0, B_pad - B), (0, 0)))
        xs = jnp.pad(xs, ((0, B_pad - B), (0, 0)))
    x2d = x.reshape(T * B_pad, D)                                   # (T*B_pad, D)

    kernel = functools.partial(
        _fused_lstm_mlp_kernel, layout=layout, num_layers=num_layers,
        hidden=H, seq_len=T, batch=B_pad)

    out = pl.pallas_call(
        kernel,
        out_shape=jax.ShapeDtypeStruct((B_pad, 1), jnp.float32),
        grid=(1,),
        in_specs=[
            pl.BlockSpec((T * B_pad, D), lambda i: (0, 0)),
            pl.BlockSpec((B_pad, S), lambda i: (0, 0)),
            pl.BlockSpec(w_slab.shape, lambda i: (0, 0)),
        ],
        out_specs=pl.BlockSpec((B_pad, 1), lambda i: (0, 0)),
        compiler_params=pltpu.CompilerParams(
            dimension_semantics=("arbitrary",)),
    )(x2d, xs, w_slab)
    return out[:B]


# ----------------------------------------------------------------------------
# Parameters: raw (PyTorch layout) + packed slab (kernel layout).
# ----------------------------------------------------------------------------
def init_raw_params(key, lstm_input_size, hidden_size, num_layers, n_static_feats):
    raw = {"lstm": [], "fc": {}}
    H = hidden_size
    k = 1.0 / (H ** 0.5)
    for layer in range(num_layers):
        d_in = lstm_input_size if layer == 0 else H
        key, k1, k2, k3, k4 = jax.random.split(key, 5)
        raw["lstm"].append({
            "w_ih": jax.random.uniform(k1, (4 * H, d_in), jnp.float32, -k, k),
            "w_hh": jax.random.uniform(k2, (4 * H, H), jnp.float32, -k, k),
            "b_ih": jax.random.uniform(k3, (4 * H,), jnp.float32, -k, k),
            "b_hh": jax.random.uniform(k4, (4 * H,), jnp.float32, -k, k),
        })
    fc_in = H + n_static_feats
    key, k1, k2, k3, k4 = jax.random.split(key, 5)
    kf1 = 1.0 / (fc_in ** 0.5)
    kf2 = 1.0 / (128 ** 0.5)
    raw["fc"] = {
        "w1": jax.random.uniform(k1, (128, fc_in), jnp.float32, -kf1, kf1),
        "b1": jax.random.uniform(k2, (128,), jnp.float32, -kf1, kf1),
        "w2": jax.random.uniform(k3, (1, 128), jnp.float32, -kf2, kf2),
        "b2": jax.random.uniform(k4, (1,), jnp.float32, -kf2, kf2),
    }
    return raw


def _permute_gate_rows(w, H):
    # PyTorch gate order (i, f, g, o) -> kernel order (i, f, o, g), along axis 0.
    return jnp.concatenate([w[:2 * H], w[3 * H:4 * H], w[2 * H:3 * H]], axis=0)


def pack_params(raw):
    """Pack all weights/biases into one lane-dense f32 slab (kernel layout).

    TODO(synk): store the slab in bf16 on v6e/v7x (keep f32 activations on v5e).
    """
    H = raw["lstm"][0]["w_hh"].shape[1]
    L = len(raw["lstm"])
    D = raw["lstm"][0]["w_ih"].shape[1]
    S = raw["fc"]["w1"].shape[1] - H
    layout = _slab_layout(D, H, L, S)

    slab = jnp.zeros((layout["rows"], layout["cols"]), jnp.float32)
    for l, lp in enumerate(raw["lstm"]):
        lo = layout["lstm"][l]
        w_ih = _permute_gate_rows(lp["w_ih"], H)                 # (4H, d_in)
        w_hh = _permute_gate_rows(lp["w_hh"], H)                 # (4H, H)
        bias = _permute_gate_rows(lp["b_ih"] + lp["b_hh"], H)    # (4H,)
        slab = slab.at[lo["wih"]:lo["wih"] + lo["d_in"], :4 * H].set(w_ih.T)
        slab = slab.at[lo["whh"]:lo["whh"] + H, :4 * H].set(w_hh.T)
        slab = slab.at[lo["b"], :4 * H].set(bias)

    fo = layout["fc"]
    w1_t = raw["fc"]["w1"].T                                      # (H+S, 128)
    slab = slab.at[fo["w1h"]:fo["w1h"] + H, :128].set(w1_t[:H])
    slab = slab.at[fo["w1s"]:fo["w1s"] + S, :128].set(w1_t[H:])
    slab = slab.at[fo["b1"], :128].set(raw["fc"]["b1"])
    slab = slab.at[fo["w2"], :128].set(raw["fc"]["w2"][0])
    slab = slab.at[fo["b2"], :].set(raw["fc"]["b2"][0])           # replicated
    return slab


# ----------------------------------------------------------------------------
# Pure-JAX reference (PyTorch semantics) used only as a sanity check.
# ----------------------------------------------------------------------------
def reference_forward(raw, x_temp, x_static):
    x = x_temp.astype(jnp.float32)                  # (B, T, D)
    B, T, _ = x.shape
    h = None
    for layer in raw["lstm"]:
        w_ih, w_hh = layer["w_ih"], layer["w_hh"]
        b = layer["b_ih"] + layer["b_hh"]
        H = w_hh.shape[1]
        h = jnp.zeros((B, H), jnp.float32)
        c = jnp.zeros((B, H), jnp.float32)
        outs = []
        for t in range(T):
            g = x[:, t, :] @ w_ih.T + h @ w_hh.T + b
            i_g = jax.nn.sigmoid(g[:, 0 * H:1 * H])
            f_g = jax.nn.sigmoid(g[:, 1 * H:2 * H])
            g_g = jnp.tanh(g[:, 2 * H:3 * H])
            o_g = jax.nn.sigmoid(g[:, 3 * H:4 * H])
            c = f_g * c + i_g * g_g
            h = o_g * jnp.tanh(c)
            outs.append(h)
        x = jnp.stack(outs, axis=1)                 # feeds next layer
    feat = jnp.concatenate([h, x_static.astype(jnp.float32)], axis=1)
    fc = raw["fc"]
    hid = jnp.maximum(feat @ fc["w1"].T + fc["b1"], 0.0)
    return hid @ fc["w2"].T + fc["b2"]              # (B, 1)


if __name__ == "__main__":
    batch = 2
    seq_len = 8
    lstm_input_size = 16
    lstm_hidden_size = 32
    lstm_num_layers = 2
    n_static_feats = 4

    key = jax.random.PRNGKey(0)
    kp, kx, ks = jax.random.split(key, 3)

    raw = init_raw_params(kp, lstm_input_size, lstm_hidden_size,
                          lstm_num_layers, n_static_feats)
    w_slab = pack_params(raw)

    x_temp = jax.random.normal(kx, (batch, seq_len, lstm_input_size), jnp.float32)
    x_static = jax.random.normal(ks, (batch, n_static_feats), jnp.float32)

    out = lstm_classifier_v2_forward(w_slab, x_temp, x_static,
                                     num_layers=lstm_num_layers,
                                     hidden_size=lstm_hidden_size)
    out = jax.block_until_ready(out)
    assert out.shape == (batch, 1), out.shape

    # Coarse correctness check vs. pure-JAX reference (tolerant of MXU precision).
    ref = reference_forward(raw, x_temp, x_static)
    max_err = float(jnp.max(jnp.abs(out - ref)))
    assert max_err < 2e-2, f"kernel/reference mismatch: {max_err}"

    print("KERNEL_OK")
</pallas_src>

<mosaic_0001>
module attributes {stable_mosaic.version = 11 : i64} {
  func.func @_fused_lstm_mlp_kernel(%arg0: i32, %arg1: memref<64x16xf32, #tpu.memory_space<vmem>>, %arg2: memref<8x4xf32, #tpu.memory_space<vmem>>, %arg3: memref<192x128xf32, #tpu.memory_space<vmem>>, %arg4: memref<8x1xf32, #tpu.memory_space<vmem>>) attributes {dimension_semantics = [#tpu.dimension_semantics<arbitrary>], iteration_bounds = array<i64: 1>, scalar_prefetch = 0 : i64, scratch_operands = 0 : i64, tpu.core_type = #tpu.core_type<tc>, window_params = [{pipeline_mode = #tpu.pipeline_mode<synchronous>, transform_indices = @transform_0, window_bounds = array<i64: 64, 16>}, {pipeline_mode = #tpu.pipeline_mode<synchronous>, transform_indices = @transform_1, window_bounds = array<i64: 8, 4>}, {pipeline_mode = #tpu.pipeline_mode<synchronous>, transform_indices = @transform_2, window_bounds = array<i64: 192, 128>}, {pipeline_mode = #tpu.pipeline_mode<synchronous>, transform_indices = @transform_3, window_bounds = array<i64: 8, 1>}]} {
    %c0 = arith.constant 0 : index
    %c0_0 = arith.constant 0 : index
    %0 = vector.load %arg1[%c0, %c0_0] : memref<64x16xf32, #tpu.memory_space<vmem>>, vector<64x16xf32>
    %c0_1 = arith.constant 0 : index
    %c0_2 = arith.constant 0 : index
    %1 = vector.load %arg3[%c0_1, %c0_2] : memref<192x128xf32, #tpu.memory_space<vmem>>, vector<16x128xf32>
    %c16 = arith.constant 16 : index
    %c0_3 = arith.constant 0 : index
    %2 = vector.load %arg3[%c16, %c0_3] : memref<192x128xf32, #tpu.memory_space<vmem>>, vector<32x128xf32>
    %c48 = arith.constant 48 : index
    %c0_4 = arith.constant 0 : index
    %3 = vector.load %arg3[%c48, %c0_4] : memref<192x128xf32, #tpu.memory_space<vmem>>, vector<1x128xf32>
    %cst = arith.constant dense<0.000000e+00> : vector<64x128xf32>
    %4 = tpu.matmul %0, %1, %cst {dimension_numbers = #tpu.dot_dimension_numbers<[1], [0], [0], [1], [0, 0, 1, 1], [], []>} : vector<64x16xf32>, vector<16x128xf32>, vector<64x128xf32> -> vector<64x128xf32>
    %5 = vector.broadcast %3 : vector<1x128xf32> to vector<64x128xf32>
    %6 = arith.addf %4, %5 : vector<64x128xf32>
    %cst_5 = arith.constant 0.000000e+00 : f32
    %7 = vector.broadcast %cst_5 : f32 to vector<8x32xf32>
    %cst_6 = arith.constant 0.000000e+00 : f32
    %8 = vector.broadcast %cst_6 : f32 to vector<8x32xf32>
    %9 = vector.extract_strided_slice %6 {offsets = [0, 0], sizes = [8, 128], strides = [1, 1]} : vector<64x128xf32> to vector<8x128xf32>
    %cst_7 = arith.constant dense<0.000000e+00> : vector<8x128xf32>
    %10 = tpu.matmul %7, %2, %cst_7 {dimension_numbers = #tpu.dot_dimension_numbers<[1], [0], [0], [1], [0, 0, 1, 1], [], []>} : vector<8x32xf32>, vector<32x128xf32>, vector<8x128xf32> -> vector<8x128xf32>
    %11 = arith.addf %9, %10 : vector<8x128xf32>
    %12 = vector.extract_strided_slice %11 {offsets = [0, 0], sizes = [8, 96], strides = [1, 1]} : vector<8x128xf32> to vector<8x96xf32>
    %13 = arith.negf %12 : vector<8x96xf32>
    %14 = math.exp %13 : vector<8x96xf32>
    %cst_8 = arith.constant 1.000000e+00 : f32
    %15 = vector.broadcast %cst_8 : f32 to vector<8x96xf32>
    %16 = arith.addf %15, %14 : vector<8x96xf32>
    %17 = arith.divf %15, %16 : vector<8x96xf32>
    %18 = vector.extract_strided_slice %11 {offsets = [0, 96], sizes = [8, 32], strides = [1, 1]} : vector<8x128xf32> to vector<8x32xf32>
    %19 = math.tanh %18 : vector<8x32xf32>
    %20 = vector.extract_strided_slice %17 {offsets = [0, 0], sizes = [8, 32], strides = [1, 1]} : vector<8x96xf32> to vector<8x32xf32>
    %21 = vector.extract_strided_slice %17 {offsets = [0, 32], sizes = [8, 32], strides = [1, 1]} : vector<8x96xf32> to vector<8x32xf32>
    %22 = vector.extract_strided_slice %17 {offsets = [0, 64], sizes = [8, 32], strides = [1, 1]} : vector<8x96xf32> to vector<8x32xf32>
    %23 = arith.mulf %21, %8 : vector<8x32xf32>
    %24 = arith.mulf %20, %19 : vector<8x32xf32>
    %25 = arith.addf %23, %24 : vector<8x32xf32>
    %26 = math.tanh %25 : vector<8x32xf32>
    %27 = arith.mulf %22, %26 : vector<8x32xf32>
    %28 = vector.extract_strided_slice %6 {offsets = [8, 0], sizes = [8, 128], strides = [1, 1]} : vector<64x128xf32> to vector<8x128xf32>
    %cst_9 = arith.constant dense<0.000000e+00> : vector<8x128xf32>
    %29 = tpu.matmul %27, %2, %cst_9 {dimension_numbers = #tpu.dot_dimension_numbers<[1], [0], [0], [1], [0, 0, 1, 1], [], []>} : vector<8x32xf32>, vector<32x128xf32>, vector<8x128xf32> -> vector<8x128xf32>
    %30 = arith.addf %28, %29 : vector<8x128xf32>
    %31 = vector.extract_strided_slice %30 {offsets = [0, 0], sizes = [8, 96], strides = [1, 1]} : vector<8x128xf32> to vector<8x96xf32>
    %32 = arith.negf %31 : vector<8x96xf32>
    %33 = math.exp %32 : vector<8x96xf32>
    %cst_10 = arith.constant 1.000000e+00 : f32
    %34 = vector.broadcast %cst_10 : f32 to vector<8x96xf32>
    %35 = arith.addf %34, %33 : vector<8x96xf32>
    %36 = arith.divf %34, %35 : vector<8x96xf32>
    %37 = vector.extract_strided_slice %30 {offsets = [0, 96], sizes = [8, 32], strides = [1, 1]} : vector<8x128xf32> to vector<8x32xf32>
    %38 = math.tanh %37 : vector<8x32xf32>
    %39 = vector.extract_strided_slice %36 {offsets = [0, 0], sizes = [8, 32], strides = [1, 1]} : vector<8x96xf32> to vector<8x32xf32>
    %40 = vector.extract_strided_slice %36 {offsets = [0, 32], sizes = [8, 32], strides = [1, 1]} : vector<8x96xf32> to vector<8x32xf32>
    %41 = vector.extract_strided_slice %36 {offsets = [0, 64], sizes = [8, 32], strides = [1, 1]} : vector<8x96xf32> to vector<8x32xf32>
    %42 = arith.mulf %40, %25 : vector<8x32xf32>
    %43 = arith.mulf %39, %38 : vector<8x32xf32>
    %44 = arith.addf %42, %43 : vector<8x32xf32>
    %45 = math.tanh %44 : vector<8x32xf32>
    %46 = arith.mulf %41, %45 : vector<8x32xf32>
    %47 = vector.extract_strided_slice %6 {offsets = [16, 0], sizes = [8, 128], strides = [1, 1]} : vector<64x128xf32> to vector<8x128xf32>
    %cst_11 = arith.constant dense<0.000000e+00> : vector<8x128xf32>
    %48 = tpu.matmul %46, %2, %cst_11 {dimension_numbers = #tpu.dot_dimension_numbers<[1], [0], [0], [1], [0, 0, 1, 1], [], []>} : vector<8x32xf32>, vector<32x128xf32>, vector<8x128xf32> -> vector<8x128xf32>
    %49 = arith.addf %47, %48 : vector<8x128xf32>
    %50 = vector.extract_strided_slice %49 {offsets = [0, 0], sizes = [8, 96], strides = [1, 1]} : vector<8x128xf32> to vector<8x96xf32>
    %51 = arith.negf %50 : vector<8x96xf32>
    %52 = math.exp %51 : vector<8x96xf32>
    %cst_12 = arith.constant 1.000000e+00 : f32
    %53 = vector.broadcast %cst_12 : f32 to vector<8x96xf32>
    %54 = arith.addf %53, %52 : vector<8x96xf32>
    %55 = arith.divf %53, %54 : vector<8x96xf32>
    %56 = vector.extract_strided_slice %49 {offsets = [0, 96], sizes = [8, 32], strides = [1, 1]} : vector<8x128xf32> to vector<8x32xf32>
    %57 = math.tanh %56 : vector<8x32xf32>
    %58 = vector.extract_strided_slice %55 {offsets = [0, 0], sizes = [8, 32], strides = [1, 1]} : vector<8x96xf32> to vector<8x32xf32>
    %59 = vector.extract_strided_slice %55 {offsets = [0, 32], sizes = [8, 32], strides = [1, 1]} : vector<8x96xf32> to vector<8x32xf32>
    %60 = vector.extract_strided_slice %55 {offsets = [0, 64], sizes = [8, 32], strides = [1, 1]} : vector<8x96xf32> to vector<8x32xf32>
    %61 = arith.mulf %59, %44 : vector<8x32xf32>
    %62 = arith.mulf %58, %57 : vector<8x32xf32>
    %63 = arith.addf %61, %62 : vector<8x32xf32>
    %64 = math.tanh %63 : vector<8x32xf32>
    %65 = arith.mulf %60, %64 : vector<8x32xf32>
    %66 = vector.extract_strided_slice %6 {offsets = [24, 0], sizes = [8, 128], strides = [1, 1]} : vector<64x128xf32> to vector<8x128xf32>
    %cst_13 = arith.constant dense<0.000000e+00> : vector<8x128xf32>
    %67 = tpu.matmul %65, %2, %cst_13 {dimension_numbers = #tpu.dot_dimension_numbers<[1], [0], [0], [1], [0, 0, 1, 1], [], []>} : vector<8x32xf32>, vector<32x128xf32>, vector<8x128xf32> -> vector<8x128xf32>
    %68 = arith.addf %66, %67 : vector<8x128xf32>
    %69 = vector.extract_strided_slice %68 {offsets = [0, 0], sizes = [8, 96], strides = [1, 1]} : vector<8x128xf32> to vector<8x96xf32>
    %70 = arith.negf %69 : vector<8x96xf32>
    %71 = math.exp %70 : vector<8x96xf32>
    %cst_14 = arith.constant 1.000000e+00 : f32
    %72 = vector.broadcast %cst_14 : f32 to vector<8x96xf32>
    %73 = arith.addf %72, %71 : vector<8x96xf32>
    %74 = arith.divf %72, %73 : vector<8x96xf32>
    %75 = vector.extract_strided_slice %68 {offsets = [0, 96], sizes = [8, 32], strides = [1, 1]} : vector<8x128xf32> to vector<8x32xf32>
    %76 = math.tanh %75 : vector<8x32xf32>
    %77 = vector.extract_strided_slice %74 {offsets = [0, 0], sizes = [8, 32], strides = [1, 1]} : vector<8x96xf32> to vector<8x32xf32>
    %78 = vector.extract_strided_slice %74 {offsets = [0, 32], sizes = [8, 32], strides = [1, 1]} : vector<8x96xf32> to vector<8x32xf32>
    %79 = vector.extract_strided_slice %74 {offsets = [0, 64], sizes = [8, 32], strides = [1, 1]} : vector<8x96xf32> to vector<8x32xf32>
    %80 = arith.mulf %78, %63 : vector<8x32xf32>
    %81 = arith.mulf %77, %76 : vector<8x32xf32>
    %82 = arith.addf %80, %81 : vector<8x32xf32>
    %83 = math.tanh %82 : vector<8x32xf32>
    %84 = arith.mulf %79, %83 : vector<8x32xf32>
    %85 = vector.extract_strided_slice %6 {offsets = [32, 0], sizes = [8, 128], strides = [1, 1]} : vector<64x128xf32> to vector<8x128xf32>
    %cst_15 = arith.constant dense<0.000000e+00> : vector<8x128xf32>
    %86 = tpu.matmul %84, %2, %cst_15 {dimension_numbers = #tpu.dot_dimension_numbers<[1], [0], [0], [1], [0, 0, 1, 1], [], []>} : vector<8x32xf32>, vector<32x128xf32>, vector<8x128xf32> -> vector<8x128xf32>
    %87 = arith.addf %85, %86 : vector<8x128xf32>
    %88 = vector.extract_strided_slice %87 {offsets = [0, 0], sizes = [8, 96], strides = [1, 1]} : vector<8x128xf32> to vector<8x96xf32>
    %89 = arith.negf %88 : vector<8x96xf32>
    %90 = math.exp %89 : vector<8x96xf32>
    %cst_16 = arith.constant 1.000000e+00 : f32
    %91 = vector.broadcast %cst_16 : f32 to vector<8x96xf32>
    %92 = arith.addf %91, %90 : vector<8x96xf32>
    %93 = arith.divf %91, %92 : vector<8x96xf32>
    %94 = vector.extract_strided_slice %87 {offsets = [0, 96], sizes = [8, 32], strides = [1, 1]} : vector<8x128xf32> to vector<8x32xf32>
    %95 = math.tanh %94 : vector<8x32xf32>
    %96 = vector.extract_strided_slice %93 {offsets = [0, 0], sizes = [8, 32], strides = [1, 1]} : vector<8x96xf32> to vector<8x32xf32>
    %97 = vector.extract_strided_slice %93 {offsets = [0, 32], sizes = [8, 32], strides = [1, 1]} : vector<8x96xf32> to vector<8x32xf32>
    %98 = vector.extract_strided_slice %93 {offsets = [0, 64], sizes = [8, 32], strides = [1, 1]} : vector<8x96xf32> to vector<8x32xf32>
    %99 = arith.mulf %97, %82 : vector<8x32xf32>
    %100 = arith.mulf %96, %95 : vector<8x32xf32>
    %101 = arith.addf %99, %100 : vector<8x32xf32>
    %102 = math.tanh %101 : vector<8x32xf32>
    %103 = arith.mulf %98, %102 : vector<8x32xf32>
    %104 = vector.extract_strided_slice %6 {offsets = [40, 0], sizes = [8, 128], strides = [1, 1]} : vector<64x128xf32> to vector<8x128xf32>
    %cst_17 = arith.constant dense<0.000000e+00> : vector<8x128xf32>
    %105 = tpu.matmul %103, %2, %cst_17 {dimension_numbers = #tpu.dot_dimension_numbers<[1], [0], [0], [1], [0, 0, 1, 1], [], []>} : vector<8x32xf32>, vector<32x128xf32>, vector<8x128xf32> -> vector<8x128xf32>
    %106 = arith.addf %104, %105 : vector<8x128xf32>
    %107 = vector.extract_strided_slice %106 {offsets = [0, 0], sizes = [8, 96], strides = [1, 1]} : vector<8x128xf32> to vector<8x96xf32>
    %108 = arith.negf %107 : vector<8x96xf32>
    %109 = math.exp %108 : vector<8x96xf32>
    %cst_18 = arith.constant 1.000000e+00 : f32
    %110 = vector.broadcast %cst_18 : f32 to vector<8x96xf32>
    %111 = arith.addf %110, %109 : vector<8x96xf32>
    %112 = arith.divf %110, %111 : vector<8x96xf32>
    %113 = vector.extract_strided_slice %106 {offsets = [0, 96], sizes = [8, 32], strides = [1, 1]} : vector<8x128xf32> to vector<8x32xf32>
    %114 = math.tanh %113 : vector<8x32xf32>
    %115 = vector.extract_strided_slice %112 {offsets = [0, 0], sizes = [8, 32], strides = [1, 1]} : vector<8x96xf32> to vector<8x32xf32>
    %116 = vector.extract_strided_slice %112 {offsets = [0, 32], sizes = [8, 32], strides = [1, 1]} : vector<8x96xf32> to vector<8x32xf32>
    %117 = vector.extract_strided_slice %112 {offsets = [0, 64], sizes = [8, 32], strides = [1, 1]} : vector<8x96xf32> to vector<8x32xf32>
    %118 = arith.mulf %116, %101 : vector<8x32xf32>
    %119 = arith.mulf %115, %114 : vector<8x32xf32>
    %120 = arith.addf %118, %119 : vector<8x32xf32>
    %121 = math.tanh %120 : vector<8x32xf32>
    %122 = arith.mulf %117, %121 : vector<8x32xf32>
    %123 = vector.extract_strided_slice %6 {offsets = [48, 0], sizes = [8, 128], strides = [1, 1]} : vector<64x128xf32> to vector<8x128xf32>
    %cst_19 = arith.constant dense<0.000000e+00> : vector<8x128xf32>
    %124 = tpu.matmul %122, %2, %cst_19 {dimension_numbers = #tpu.dot_dimension_numbers<[1], [0], [0], [1], [0, 0, 1, 1], [], []>} : vector<8x32xf32>, vector<32x128xf32>, vector<8x128xf32> -> vector<8x128xf32>
    %125 = arith.addf %123, %124 : vector<8x128xf32>
    %126 = vector.extract_strided_slice %125 {offsets = [0, 0], sizes = [8, 96], strides = [1, 1]} : vector<8x128xf32> to vector<8x96xf32>
    %127 = arith.negf %126 : vector<8x96xf32>
    %128 = math.exp %127 : vector<8x96xf32>
    %cst_20 = arith.constant 1.000000e+00 : f32
    %129 = vector.broadcast %cst_20 : f32 to vector<8x96xf32>
    %130 = arith.addf %129, %128 : vector<8x96xf32>
    %131 = arith.divf %129, %130 : vector<8x96xf32>
    %132 = vector.extract_strided_slice %125 {offsets = [0, 96], sizes = [8, 32], strides = [1, 1]} : vector<8x128xf32> to vector<8x32xf32>
    %133 = math.tanh %132 : vector<8x32xf32>
    %134 = vector.extract_strided_slice %131 {offsets = [0, 0], sizes = [8, 32], strides = [1, 1]} : vector<8x96xf32> to vector<8x32xf32>
    %135 = vector.extract_strided_slice %131 {offsets = [0, 32], sizes = [8, 32], strides = [1, 1]} : vector<8x96xf32> to vector<8x32xf32>
    %136 = vector.extract_strided_slice %131 {offsets = [0, 64], sizes = [8, 32], strides = [1, 1]} : vector<8x96xf32> to vector<8x32xf32>
    %137 = arith.mulf %135, %120 : vector<8x32xf32>
    %138 = arith.mulf %134, %133 : vector<8x32xf32>
    %139 = arith.addf %137, %138 : vector<8x32xf32>
    %140 = math.tanh %139 : vector<8x32xf32>
    %141 = arith.mulf %136, %140 : vector<8x32xf32>
    %142 = vector.extract_strided_slice %6 {offsets = [56, 0], sizes = [8, 128], strides = [1, 1]} : vector<64x128xf32> to vector<8x128xf32>
    %cst_21 = arith.constant dense<0.000000e+00> : vector<8x128xf32>
    %143 = tpu.matmul %141, %2, %cst_21 {dimension_numbers = #tpu.dot_dimension_numbers<[1], [0], [0], [1], [0, 0, 1, 1], [], []>} : vector<8x32xf32>, vector<32x128xf32>, vector<8x128xf32> -> vector<8x128xf32>
    %144 = arith.addf %142, %143 : vector<8x128xf32>
    %145 = vector.extract_strided_slice %144 {offsets = [0, 0], sizes = [8, 96], strides = [1, 1]} : vector<8x128xf32> to vector<8x96xf32>
    %146 = arith.negf %145 : vector<8x96xf32>
    %147 = math.exp %146 : vector<8x96xf32>
    %cst_22 = arith.constant 1.000000e+00 : f32
    %148 = vector.broadcast %cst_22 : f32 to vector<8x96xf32>
    %149 = arith.addf %148, %147 : vector<8x96xf32>
    %150 = arith.divf %148, %149 : vector<8x96xf32>
    %151 = vector.extract_strided_slice %144 {offsets = [0, 96], sizes = [8, 32], strides = [1, 1]} : vector<8x128xf32> to vector<8x32xf32>
    %152 = math.tanh %151 : vector<8x32xf32>
    %153 = vector.extract_strided_slice %150 {offsets = [0, 0], sizes = [8, 32], strides = [1, 1]} : vector<8x96xf32> to vector<8x32xf32>
    %154 = vector.extract_strided_slice %150 {offsets = [0, 32], sizes = [8, 32], strides = [1, 1]} : vector<8x96xf32> to vector<8x32xf32>
    %155 = vector.extract_strided_slice %150 {offsets = [0, 64], sizes = [8, 32], strides = [1, 1]} : vector<8x96xf32> to vector<8x32xf32>
    %156 = arith.mulf %154, %139 : vector<8x32xf32>
    %157 = arith.mulf %153, %152 : vector<8x32xf32>
    %158 = arith.addf %156, %157 : vector<8x32xf32>
    %159 = math.tanh %158 : vector<8x32xf32>
    %160 = arith.mulf %155, %159 : vector<8x32xf32>
    %161 = tpu.concatenate %27, %46, %65, %84, %103, %122, %141, %160 in 0 : vector<8x32xf32>, vector<8x32xf32>, vector<8x32xf32>, vector<8x32xf32>, vector<8x32xf32>, vector<8x32xf32>, vector<8x32xf32>, vector<8x32xf32> -> vector<64x32xf32>
    %c56 = arith.constant 56 : index
    %c0_23 = arith.constant 0 : index
    %162 = vector.load %arg3[%c56, %c0_23] : memref<192x128xf32, #tpu.memory_space<vmem>>, vector<32x128xf32>
    %c88 = arith.constant 88 : index
    %c0_24 = arith.constant 0 : index
    %163 = vector.load %arg3[%c88, %c0_24] : memref<192x128xf32, #tpu.memory_space<vmem>>, vector<32x128xf32>
    %c120 = arith.constant 120 : index
    %c0_25 = arith.constant 0 : index
    %164 = vector.load %arg3[%c120, %c0_25] : memref<192x128xf32, #tpu.memory_space<vmem>>, vector<1x128xf32>
    %cst_26 = arith.constant dense<0.000000e+00> : vector<64x128xf32>
    %165 = tpu.matmul %161, %162, %cst_26 {dimension_numbers = #tpu.dot_dimension_numbers<[1], [0], [0], [1], [0, 0, 1, 1], [], []>} : vector<64x32xf32>, vector<32x128xf32>, vector<64x128xf32> -> vector<64x128xf32>
    %166 = vector.broadcast %164 : vector<1x128xf32> to vector<64x128xf32>
    %167 = arith.addf %165, %166 : vector<64x128xf32>
    %cst_27 = arith.constant 0.000000e+00 : f32
    %168 = vector.broadcast %cst_27 : f32 to vector<8x32xf32>
    %cst_28 = arith.constant 0.000000e+00 : f32
    %169 = vector.broadcast %cst_28 : f32 to vector<8x32xf32>
    %170 = vector.extract_strided_slice %167 {offsets = [0, 0], sizes = [8, 128], strides = [1, 1]} : vector<64x128xf32> to vector<8x128xf32>
    %cst_29 = arith.constant dense<0.000000e+00> : vector<8x128xf32>
    %171 = tpu.matmul %168, %163, %cst_29 {dimension_numbers = #tpu.dot_dimension_numbers<[1], [0], [0], [1], [0, 0, 1, 1], [], []>} : vector<8x32xf32>, vector<32x128xf32>, vector<8x128xf32> -> vector<8x128xf32>
    %172 = arith.addf %170, %171 : vector<8x128xf32>
    %173 = vector.extract_strided_slice %172 {offsets = [0, 0], sizes = [8, 96], strides = [1, 1]} : vector<8x128xf32> to vector<8x96xf32>
    %174 = arith.negf %173 : vector<8x96xf32>
    %175 = math.exp %174 : vector<8x96xf32>
    %cst_30 = arith.constant 1.000000e+00 : f32
    %176 = vector.broadcast %cst_30 : f32 to vector<8x96xf32>
    %177 = arith.addf %176, %175 : vector<8x96xf32>
    %178 = arith.divf %176, %177 : vector<8x96xf32>
    %179 = vector.extract_strided_slice %172 {offsets = [0, 96], sizes = [8, 32], strides = [1, 1]} : vector<8x128xf32> to vector<8x32xf32>
    %180 = math.tanh %179 : vector<8x32xf32>
    %181 = vector.extract_strided_slice %178 {offsets = [0, 0], sizes = [8, 32], strides = [1, 1]} : vector<8x96xf32> to vector<8x32xf32>
    %182 = vector.extract_strided_slice %178 {offsets = [0, 32], sizes = [8, 32], strides = [1, 1]} : vector<8x96xf32> to vector<8x32xf32>
    %183 = vector.extract_strided_slice %178 {offsets = [0, 64], sizes = [8, 32], strides = [1, 1]} : vector<8x96xf32> to vector<8x32xf32>
    %184 = arith.mulf %182, %169 : vector<8x32xf32>
    %185 = arith.mulf %181, %180 : vector<8x32xf32>
    %186 = arith.addf %184, %185 : vector<8x32xf32>
    %187 = math.tanh %186 : vector<8x32xf32>
    %188 = arith.mulf %183, %187 : vector<8x32xf32>
    %189 = vector.extract_strided_slice %167 {offsets = [8, 0], sizes = [8, 128], strides = [1, 1]} : vector<64x128xf32> to vector<8x128xf32>
    %cst_31 = arith.constant dense<0.000000e+00> : vector<8x128xf32>
    %190 = tpu.matmul %188, %163, %cst_31 {dimension_numbers = #tpu.dot_dimension_numbers<[1], [0], [0], [1], [0, 0, 1, 1], [], []>} : vector<8x32xf32>, vector<32x128xf32>, vector<8x128xf32> -> vector<8x128xf32>
    %191 = arith.addf %189, %190 : vector<8x128xf32>
    %192 = vector.extract_strided_slice %191 {offsets = [0, 0], sizes = [8, 96], strides = [1, 1]} : vector<8x128xf32> to vector<8x96xf32>
    %193 = arith.negf %192 : vector<8x96xf32>
    %194 = math.exp %193 : vector<8x96xf32>
    %cst_32 = arith.constant 1.000000e+00 : f32
    %195 = vector.broadcast %cst_32 : f32 to vector<8x96xf32>
    %196 = arith.addf %195, %194 : vector<8x96xf32>
    %197 = arith.divf %195, %196 : vector<8x96xf32>
    %198 = vector.extract_strided_slice %191 {offsets = [0, 96], sizes = [8, 32], strides = [1, 1]} : vector<8x128xf32> to vector<8x32xf32>
    %199 = math.tanh %198 : vector<8x32xf32>
    %200 = vector.extract_strided_slice %197 {offsets = [0, 0], sizes = [8, 32], strides = [1, 1]} : vector<8x96xf32> to vector<8x32xf32>
    %201 = vector.extract_strided_slice %197 {offsets = [0, 32], sizes = [8, 32], strides = [1, 1]} : vector<8x96xf32> to vector<8x32xf32>
    %202 = vector.extract_strided_slice %197 {offsets = [0, 64], sizes = [8, 32], strides = [1, 1]} : vector<8x96xf32> to vector<8x32xf32>
    %203 = arith.mulf %201, %186 : vector<8x32xf32>
    %204 = arith.mulf %200, %199 : vector<8x32xf32>
    %205 = arith.addf %203, %204 : vector<8x32xf32>
    %206 = math.tanh %205 : vector<8x32xf32>
    %207 = arith.mulf %202, %206 : vector<8x32xf32>
    %208 = vector.extract_strided_slice %167 {offsets = [16, 0], sizes = [8, 128], strides = [1, 1]} : vector<64x128xf32> to vector<8x128xf32>
    %cst_33 = arith.constant dense<0.000000e+00> : vector<8x128xf32>
    %209 = tpu.matmul %207, %163, %cst_33 {dimension_numbers = #tpu.dot_dimension_numbers<[1], [0], [0], [1], [0, 0, 1, 1], [], []>} : vector<8x32xf32>, vector<32x128xf32>, vector<8x128xf32> -> vector<8x128xf32>
    %210 = arith.addf %208, %209 : vector<8x128xf32>
    %211 = vector.extract_strided_slice %210 {offsets = [0, 0], sizes = [8, 96], strides = [1, 1]} : vector<8x128xf32> to vector<8x96xf32>
    %212 = arith.negf %211 : vector<8x96xf32>
    %213 = math.exp %212 : vector<8x96xf32>
    %cst_34 = arith.constant 1.000000e+00 : f32
    %214 = vector.broadcast %cst_34 : f32 to vector<8x96xf32>
    %215 = arith.addf %214, %213 : vector<8x96xf32>
    %216 = arith.divf %214, %215 : vector<8x96xf32>
    %217 = vector.extract_strided_slice %210 {offsets = [0, 96], sizes = [8, 32], strides = [1, 1]} : vector<8x128xf32> to vector<8x32xf32>
    %218 = math.tanh %217 : vector<8x32xf32>
    %219 = vector.extract_strided_slice %216 {offsets = [0, 0], sizes = [8, 32], strides = [1, 1]} : vector<8x96xf32> to vector<8x32xf32>
    %220 = vector.extract_strided_slice %216 {offsets = [0, 32], sizes = [8, 32], strides = [1, 1]} : vector<8x96xf32> to vector<8x32xf32>
    %221 = vector.extract_strided_slice %216 {offsets = [0, 64], sizes = [8, 32], strides = [1, 1]} : vector<8x96xf32> to vector<8x32xf32>
    %222 = arith.mulf %220, %205 : vector<8x32xf32>
    %223 = arith.mulf %219, %218 : vector<8x32xf32>
    %224 = arith.addf %222, %223 : vector<8x32xf32>
    %225 = math.tanh %224 : vector<8x32xf32>
    %226 = arith.mulf %221, %225 : vector<8x32xf32>
    %227 = vector.extract_strided_slice %167 {offsets = [24, 0], sizes = [8, 128], strides = [1, 1]} : vector<64x128xf32> to vector<8x128xf32>
    %cst_35 = arith.constant dense<0.000000e+00> : vector<8x128xf32>
    %228 = tpu.matmul %226, %163, %cst_35 {dimension_numbers = #tpu.dot_dimension_numbers<[1], [0], [0], [1], [0, 0, 1, 1], [], []>} : vector<8x32xf32>, vector<32x128xf32>, vector<8x128xf32> -> vector<8x128xf32>
    %229 = arith.addf %227, %228 : vector<8x128xf32>
    %230 = vector.extract_strided_slice %229 {offsets = [0, 0], sizes = [8, 96], strides = [1, 1]} : vector<8x128xf32> to vector<8x96xf32>
    %231 = arith.negf %230 : vector<8x96xf32>
    %232 = math.exp %231 : vector<8x96xf32>
    %cst_36 = arith.constant 1.000000e+00 : f32
    %233 = vector.broadcast %cst_36 : f32 to vector<8x96xf32>
    %234 = arith.addf %233, %232 : vector<8x96xf32>
    %235 = arith.divf %233, %234 : vector<8x96xf32>
    %236 = vector.extract_strided_slice %229 {offsets = [0, 96], sizes = [8, 32], strides = [1, 1]} : vector<8x128xf32> to vector<8x32xf32>
    %237 = math.tanh %236 : vector<8x32xf32>
    %238 = vector.extract_strided_slice %235 {offsets = [0, 0], sizes = [8, 32], strides = [1, 1]} : vector<8x96xf32> to vector<8x32xf32>
    %239 = vector.extract_strided_slice %235 {offsets = [0, 32], sizes = [8, 32], strides = [1, 1]} : vector<8x96xf32> to vector<8x32xf32>
    %240 = vector.extract_strided_slice %235 {offsets = [0, 64], sizes = [8, 32], strides = [1, 1]} : vector<8x96xf32> to vector<8x32xf32>
    %241 = arith.mulf %239, %224 : vector<8x32xf32>
    %242 = arith.mulf %238, %237 : vector<8x32xf32>
    %243 = arith.addf %241, %242 : vector<8x32xf32>
    %244 = math.tanh %243 : vector<8x32xf32>
    %245 = arith.mulf %240, %244 : vector<8x32xf32>
    %246 = vector.extract_strided_slice %167 {offsets = [32, 0], sizes = [8, 128], strides = [1, 1]} : vector<64x128xf32> to vector<8x128xf32>
    %cst_37 = arith.constant dense<0.000000e+00> : vector<8x128xf32>
    %247 = tpu.matmul %245, %163, %cst_37 {dimension_numbers = #tpu.dot_dimension_numbers<[1], [0], [0], [1], [0, 0, 1, 1], [], []>} : vector<8x32xf32>, vector<32x128xf32>, vector<8x128xf32> -> vector<8x128xf32>
    %248 = arith.addf %246, %247 : vector<8x128xf32>
    %249 = vector.extract_strided_slice %248 {offsets = [0, 0], sizes = [8, 96], strides = [1, 1]} : vector<8x128xf32> to vector<8x96xf32>
    %250 = arith.negf %249 : vector<8x96xf32>
    %251 = math.exp %250 : vector<8x96xf32>
    %cst_38 = arith.constant 1.000000e+00 : f32
    %252 = vector.broadcast %cst_38 : f32 to vector<8x96xf32>
    %253 = arith.addf %252, %251 : vector<8x96xf32>
    %254 = arith.divf %252, %253 : vector<8x96xf32>
    %255 = vector.extract_strided_slice %248 {offsets = [0, 96], sizes = [8, 32], strides = [1, 1]} : vector<8x128xf32> to vector<8x32xf32>
    %256 = math.tanh %255 : vector<8x32xf32>
    %257 = vector.extract_strided_slice %254 {offsets = [0, 0], sizes = [8, 32], strides = [1, 1]} : vector<8x96xf32> to vector<8x32xf32>
    %258 = vector.extract_strided_slice %254 {offsets = [0, 32], sizes = [8, 32], strides = [1, 1]} : vector<8x96xf32> to vector<8x32xf32>
    %259 = vector.extract_strided_slice %254 {offsets = [0, 64], sizes = [8, 32], strides = [1, 1]} : vector<8x96xf32> to vector<8x32xf32>
    %260 = arith.mulf %258, %243 : vector<8x32xf32>
    %261 = arith.mulf %257, %256 : vector<8x32xf32>
    %262 = arith.addf %260, %261 : vector<8x32xf32>
    %263 = math.tanh %262 : vector<8x32xf32>
    %264 = arith.mulf %259, %263 : vector<8x32xf32>
    %265 = vector.extract_strided_slice %167 {offsets = [40, 0], sizes = [8, 128], strides = [1, 1]} : vector<64x128xf32> to vector<8x128xf32>
    %cst_39 = arith.constant dense<0.000000e+00> : vector<8x128xf32>
    %266 = tpu.matmul %264, %163, %cst_39 {dimension_numbers = #tpu.dot_dimension_numbers<[1], [0], [0], [1], [0, 0, 1, 1], [], []>} : vector<8x32xf32>, vector<32x128xf32>, vector<8x128xf32> -> vector<8x128xf32>
    %267 = arith.addf %265, %266 : vector<8x128xf32>
    %268 = vector.extract_strided_slice %267 {offsets = [0, 0], sizes = [8, 96], strides = [1, 1]} : vector<8x128xf32> to vector<8x96xf32>
    %269 = arith.negf %268 : vector<8x96xf32>
    %270 = math.exp %269 : vector<8x96xf32>
    %cst_40 = arith.constant 1.000000e+00 : f32
    %271 = vector.broadcast %cst_40 : f32 to vector<8x96xf32>
    %272 = arith.addf %271, %270 : vector<8x96xf32>
    %273 = arith.divf %271, %272 : vector<8x96xf32>
    %274 = vector.extract_strided_slice %267 {offsets = [0, 96], sizes = [8, 32], strides = [1, 1]} : vector<8x128xf32> to vector<8x32xf32>
    %275 = math.tanh %274 : vector<8x32xf32>
    %276 = vector.extract_strided_slice %273 {offsets = [0, 0], sizes = [8, 32], strides = [1, 1]} : vector<8x96xf32> to vector<8x32xf32>
    %277 = vector.extract_strided_slice %273 {offsets = [0, 32], sizes = [8, 32], strides = [1, 1]} : vector<8x96xf32> to vector<8x32xf32>
    %278 = vector.extract_strided_slice %273 {offsets = [0, 64], sizes = [8, 32], strides = [1, 1]} : vector<8x96xf32> to vector<8x32xf32>
    %279 = arith.mulf %277, %262 : vector<8x32xf32>
    %280 = arith.mulf %276, %275 : vector<8x32xf32>
    %281 = arith.addf %279, %280 : vector<8x32xf32>
    %282 = math.tanh %281 : vector<8x32xf32>
    %283 = arith.mulf %278, %282 : vector<8x32xf32>
    %284 = vector.extract_strided_slice %167 {offsets = [48, 0], sizes = [8, 128], strides = [1, 1]} : vector<64x128xf32> to vector<8x128xf32>
    %cst_41 = arith.constant dense<0.000000e+00> : vector<8x128xf32>
    %285 = tpu.matmul %283, %163, %cst_41 {dimension_numbers = #tpu.dot_dimension_numbers<[1], [0], [0], [1], [0, 0, 1, 1], [], []>} : vector<8x32xf32>, vector<32x128xf32>, vector<8x128xf32> -> vector<8x128xf32>
    %286 = arith.addf %284, %285 : vector<8x128xf32>
    %287 = vector.extract_strided_slice %286 {offsets = [0, 0], sizes = [8, 96], strides = [1, 1]} : vector<8x128xf32> to vector<8x96xf32>
    %288 = arith.negf %287 : vector<8x96xf32>
    %289 = math.exp %288 : vector<8x96xf32>
    %cst_42 = arith.constant 1.000000e+00 : f32
    %290 = vector.broadcast %cst_42 : f32 to vector<8x96xf32>
    %291 = arith.addf %290, %289 : vector<8x96xf32>
    %292 = arith.divf %290, %291 : vector<8x96xf32>
    %293 = vector.extract_strided_slice %286 {offsets = [0, 96], sizes = [8, 32], strides = [1, 1]} : vector<8x128xf32> to vector<8x32xf32>
    %294 = math.tanh %293 : vector<8x32xf32>
    %295 = vector.extract_strided_slice %292 {offsets = [0, 0], sizes = [8, 32], strides = [1, 1]} : vector<8x96xf32> to vector<8x32xf32>
    %296 = vector.extract_strided_slice %292 {offsets = [0, 32], sizes = [8, 32], strides = [1, 1]} : vector<8x96xf32> to vector<8x32xf32>
    %297 = vector.extract_strided_slice %292 {offsets = [0, 64], sizes = [8, 32], strides = [1, 1]} : vector<8x96xf32> to vector<8x32xf32>
    %298 = arith.mulf %296, %281 : vector<8x32xf32>
    %299 = arith.mulf %295, %294 : vector<8x32xf32>
    %300 = arith.addf %298, %299 : vector<8x32xf32>
    %301 = math.tanh %300 : vector<8x32xf32>
    %302 = arith.mulf %297, %301 : vector<8x32xf32>
    %303 = vector.extract_strided_slice %167 {offsets = [56, 0], sizes = [8, 128], strides = [1, 1]} : vector<64x128xf32> to vector<8x128xf32>
    %cst_43 = arith.constant dense<0.000000e+00> : vector<8x128xf32>
    %304 = tpu.matmul %302, %163, %cst_43 {dimension_numbers = #tpu.dot_dimension_numbers<[1], [0], [0], [1], [0, 0, 1, 1], [], []>} : vector<8x32xf32>, vector<32x128xf32>, vector<8x128xf32> -> vector<8x128xf32>
    %305 = arith.addf %303, %304 : vector<8x128xf32>
    %306 = vector.extract_strided_slice %305 {offsets = [0, 0], sizes = [8, 96], strides = [1, 1]} : vector<8x128xf32> to vector<8x96xf32>
    %307 = arith.negf %306 : vector<8x96xf32>
    %308 = math.exp %307 : vector<8x96xf32>
    %cst_44 = arith.constant 1.000000e+00 : f32
    %309 = vector.broadcast %cst_44 : f32 to vector<8x96xf32>
    %310 = arith.addf %309, %308 : vector<8x96xf32>
    %311 = arith.divf %309, %310 : vector<8x96xf32>
    %312 = vector.extract_strided_slice %305 {offsets = [0, 96], sizes = [8, 32], strides = [1, 1]} : vector<8x128xf32> to vector<8x32xf32>
    %313 = math.tanh %312 : vector<8x32xf32>
    %314 = vector.extract_strided_slice %311 {offsets = [0, 0], sizes = [8, 32], strides = [1, 1]} : vector<8x96xf32> to vector<8x32xf32>
    %315 = vector.extract_strided_slice %311 {offsets = [0, 32], sizes = [8, 32], strides = [1, 1]} : vector<8x96xf32> to vector<8x32xf32>
    %316 = vector.extract_strided_slice %311 {offsets = [0, 64], sizes = [8, 32], strides = [1, 1]} : vector<8x96xf32> to vector<8x32xf32>
    %317 = arith.mulf %315, %300 : vector<8x32xf32>
    %318 = arith.mulf %314, %313 : vector<8x32xf32>
    %319 = arith.addf %317, %318 : vector<8x32xf32>
    %320 = math.tanh %319 : vector<8x32xf32>
    %321 = arith.mulf %316, %320 : vector<8x32xf32>
    %c128 = arith.constant 128 : index
    %c0_45 = arith.constant 0 : index
    %322 = vector.load %arg3[%c128, %c0_45] : memref<192x128xf32, #tpu.memory_space<vmem>>, vector<32x128xf32>
    %c160 = arith.constant 160 : index
    %c0_46 = arith.constant 0 : index
    %323 = vector.load %arg3[%c160, %c0_46] : memref<192x128xf32, #tpu.memory_space<vmem>>, vector<4x128xf32>
    %c168 = arith.constant 168 : index
    %c0_47 = arith.constant 0 : index
    %324 = vector.load %arg3[%c168, %c0_47] : memref<192x128xf32, #tpu.memory_space<vmem>>, vector<1x128xf32>
    %c176 = arith.constant 176 : index
    %c0_48 = arith.constant 0 : index
    %325 = vector.load %arg3[%c176, %c0_48] : memref<192x128xf32, #tpu.memory_space<vmem>>, vector<1x128xf32>
    %c184 = arith.constant 184 : index
    %c0_49 = arith.constant 0 : index
    %326 = vector.load %arg3[%c184, %c0_49] : memref<192x128xf32, #tpu.memory_space<vmem>>, vector<1x128xf32>
    %cst_50 = arith.constant dense<0.000000e+00> : vector<8x128xf32>
    %327 = tpu.matmul %321, %322, %cst_50 {dimension_numbers = #tpu.dot_dimension_numbers<[1], [0], [0], [1], [0, 0, 1, 1], [], []>} : vector<8x32xf32>, vector<32x128xf32>, vector<8x128xf32> -> vector<8x128xf32>
    %c0_51 = arith.constant 0 : index
    %c0_52 = arith.constant 0 : index
    %328 = vector.load %arg2[%c0_51, %c0_52] : memref<8x4xf32, #tpu.memory_space<vmem>>, vector<8x4xf32>
    %cst_53 = arith.constant dense<0.000000e+00> : vector<8x128xf32>
    %329 = tpu.matmul %328, %323, %cst_53 {dimension_numbers = #tpu.dot_dimension_numbers<[1], [0], [0], [1], [0, 0, 1, 1], [], []>} : vector<8x4xf32>, vector<4x128xf32>, vector<8x128xf32> -> vector<8x128xf32>
    %330 = arith.addf %327, %329 : vector<8x128xf32>
    %331 = vector.broadcast %324 : vector<1x128xf32> to vector<8x128xf32>
    %332 = arith.addf %330, %331 : vector<8x128xf32>
    %cst_54 = arith.constant 0.000000e+00 : f32
    %333 = vector.broadcast %cst_54 : f32 to vector<8x128xf32>
    %334 = arith.maximumf %332, %333 : vector<8x128xf32>
    %335 = vector.broadcast %325 : vector<1x128xf32> to vector<8x128xf32>
    %336 = arith.mulf %334, %335 : vector<8x128xf32>
    %cst_55 = arith.constant dense<0.000000e+00> : vector<8xf32>
    %337 = vector.multi_reduction <add>, %336, %cst_55 [1] : vector<8x128xf32> to vector<8xf32>
    %338 = vector.shape_cast %337 : vector<8xf32> to vector<8x1xf32>
    %339 = vector.extract_strided_slice %326 {offsets = [0, 0], sizes = [1, 1], strides = [1, 1]} : vector<1x128xf32> to vector<1x1xf32>
    %340 = vector.broadcast %339 : vector<1x1xf32> to vector<8x1xf32>
    %341 = arith.addf %338, %340 : vector<8x1xf32>
    %c0_56 = arith.constant 0 : index
    %c0_57 = arith.constant 0 : index
    %342 = vector.load %arg4[%c0_56, %c0_57] : memref<8x1xf32, #tpu.memory_space<vmem>>, vector<8x1xf32>
    tpu.vector_store %arg4[%c0_56, %c0_57], %341 {strides = array<i32>} : memref<8x1xf32, #tpu.memory_space<vmem>>, vector<8x1xf32>,
    return
  }
  func.func @transform_0(%arg0: i32) -> (i32, i32) {
    %c0_i32 = arith.constant 0 : i32
    %c0_i32_0 = arith.constant 0 : i32
    %c0_i32_1 = arith.constant 0 : i32
    return %c0_i32, %c0_i32_0 : i32, i32
  }
  func.func @transform_1(%arg0: i32) -> (i32, i32) {
    %c0_i32 = arith.constant 0 : i32
    %c0_i32_0 = arith.constant 0 : i32
    %c0_i32_1 = arith.constant 0 : i32
    return %c0_i32, %c0_i32_0 : i32, i32
  }
  func.func @transform_2(%arg0: i32) -> (i32, i32) {
    %c0_i32 = arith.constant 0 : i32
    %c0_i32_0 = arith.constant 0 : i32
    %c0_i32_1 = arith.constant 0 : i32
    return %c0_i32, %c0_i32_0 : i32, i32
  }
  func.func @transform_3(%arg0: i32) -> (i32, i32) {
    %c0_i32 = arith.constant 0 : i32
    %c0_i32_0 = arith.constant 0 : i32
    %c0_i32_1 = arith.constant 0 : i32
    return %c0_i32, %c0_i32_0 : i32, i32
  }
}

</mosaic_0001>

<llo_original>
// kernel: lstm_classifier_v2_forward.1
$region0: #{lstm_classifier_v2_forward.1}
  #allocation0 [shape = 'u32[]', space=smem, size = 0x4, offset = 0x4, fixed_abs, tag = 'smem constant byte address 0x4 - core index']
  #allocation1 [shape = 'u32[144,128]{1,0:T(1,128)}', space=vmem, size = 0x12000, scoped, tag = 'internal scratch']
  %s0 = inlined_call_operand.vmem [shape: f32[64,16], index: 0, kind: input, shape index: {}]
  %s1 = inlined_call_operand.vmem [shape: f32[8,4], index: 1, kind: input, shape index: {}]
  %s2 = inlined_call_operand.hbm [shape: f32[192,128], index: 2, kind: input, shape index: {}]
  %s3 = inlined_call_operand.vmem [shape: f32[8,1], index: 3, kind: output, shape index: {}]
  %s4 = sld [smem:[#allocation0]]
  $region26: #{lstm_classifier_v2_forward.1} parent=0
    _
  %s6 = ssub.s32 1, %s4
  %s7 = scalar_select 0, %s6, %s4
  $region1: #{lstm_classifier_v2_forward.1} parent=0
    #allocation2 [shape = 'u8[98304]{0}', space=vmem, size = 0x18000, scoped, tag = 'input window, operand 2, single buffered']
    #allocation3 [shape = 's32[1]{0}', space=sflag, size = 0x4, scoped, tag = 'scoped memory for lstm_classifier_v2_forward.1']
    %8 = vsyncpa [#allocation3], 0
    // Predicated region
    $region2: #{lstm_classifier_v2_forward.1} parent=1 // pred_check
      _
    $region3: #{lstm_classifier_v2_forward.1} parent=1 // pred_check_branch
      %10 = sbr.rel (0) target = $region5
    $region4: #{lstm_classifier_v2_forward.1} parent=1 // pred_region
      _
    $region5: #{lstm_classifier_v2_forward.1} parent=1 // pred_fallthru
      _
    // Predicated region
    $region6: #{lstm_classifier_v2_forward.1} parent=1 // pred_check
      _
    $region7: #{lstm_classifier_v2_forward.1} parent=1 // pred_check_branch
      %12 = sbr.rel (0) target = $region9
    $region8: #{lstm_classifier_v2_forward.1} parent=1 // pred_region
      _
    $region9: #{lstm_classifier_v2_forward.1} parent=1 // pred_fallthru
      _
    // Predicated region
    $region10: #{lstm_classifier_v2_forward.1} parent=1 // pred_check
      _
    $region11: #{lstm_classifier_v2_forward.1} parent=1 // pred_check_branch
      %14 = sbr.rel (0) target = $region13
    $region12: #{lstm_classifier_v2_forward.1} parent=1 // pred_region
      %s16 = ssub.s32 3072, 3072
      %17 = vsyncadd [#allocation3], %s16
      %s18 = sshll.u32 [#allocation2], 4
      %s19 = int_to_ptr.vmem [resolvable:$true] %s18
      %24 = dma.hbm_to_vmem [thread:$0]  %s2, 3072, %s19, [#allocation3], 128, 128, 8
    $region13: #{lstm_classifier_v2_forward.1} parent=1 // pred_fallthru
      _
    // Predicated region
    $region14: #{lstm_classifier_v2_forward.1} parent=1 // pred_check
      _
    $region15: #{lstm_classifier_v2_forward.1} parent=1 // pred_check_branch
      %26 = sbr.rel (0) target = $region17
    $region16: #{lstm_classifier_v2_forward.1} parent=1 // pred_region
      %27 = dma.done [#allocation3], 3072
    $region17: #{lstm_classifier_v2_forward.1} parent=1 // pred_fallthru
      _
    %v28 = vld [vmem:[%s0] sm:$0xff]
    %v29 = vld [vmem:[%s0 + $0x8] sm:$0xff]
    %v30 = vld [vmem:[%s0 + $0x10] sm:$0xff]
    %v31 = vld [vmem:[%s0 + $0x18] sm:$0xff]
    %v32 = vld [vmem:[%s0 + $0x20] sm:$0xff]
    %v33 = vld [vmem:[%s0 + $0x28] sm:$0xff]
    %v34 = vld [vmem:[%s0 + $0x30] sm:$0xff]
    %v35 = vld [vmem:[%s0 + $0x38] sm:$0xff]
    %v36 = vld [vmem:[#allocation2] sm:$0xff]
    %v37 = vld [vmem:[#allocation2 + $0x8] sm:$0xff]
    %v38 = vld [vmem:[#allocation2 + $0x10] sm:$0xff]
    %v39 = vld [vmem:[#allocation2 + $0x18] sm:$0xff]
    %v40 = vld [vmem:[#allocation2 + $0x20] sm:$0xff]
    %v41 = vld [vmem:[#allocation2 + $0x28] sm:$0xff]
    %v42 = vld [vmem:[#allocation2 + $0x30] sm:$0x1]
    %v43 = vlaneseq
    %v44 = vshrl.u32 %v43, 7
    %v45 = vsub.s32 0, %v44
    %v46 = vrot.slane %v42, %v45
    %vm47 = vcmask 130048
    %v49 = vsel %vm47, %v28, 0
    %v52 = vsel %vm47, %v29, 0
    %v55 = vsel %vm47, %v30, 0
    %v58 = vsel %vm47, %v31, 0
    %v61 = vsel %vm47, %v32, 0
    %v64 = vsel %vm47, %v33, 0
    %v67 = vsel %vm47, %v34, 0
    %v70 = vsel %vm47, %v35, 0
    %72 = vmatprep.subr.mxu0 0.0
    %73 = vmatpush1.msra.mxu0 %v36
    %74 = vmatprep.subr.mxu0 0.0
    %75 = vmatpush1.msra.mxu0 %v37
    %76 = vmatprep.subr.mxu0 0.0
    %77 = vmatpush1.msra.mxu0 0.0
    %78 = vmatprep.subr.mxu0 0.0
    %79 = vmatpush1.msra.mxu0 0.0
    %80 = vmatprep.subr.mxu0 0.0
    %81 = vmatpush1.msra.mxu0 0.0
    %82 = vmatprep.subr.mxu0 0.0
    %83 = vmatpush1.msra.mxu0 0.0
    %84 = vmatprep.subr.mxu0 0.0
    %85 = vmatpush1.msra.mxu0 0.0
    %86 = vmatprep.subr.mxu0 0.0
    %87 = vmatpush1.msra.mxu0 0.0
    %88 = vmatprep.subr.mxu0 0.0
    %89 = vmatpush1.msra.mxu0 0.0
    %90 = vmatprep.subr.mxu0 0.0
    %91 = vmatpush1.msra.mxu0 0.0
    %92 = vmatprep.subr.mxu0 0.0
    %93 = vmatpush1.msra.mxu0 0.0
    %94 = vmatprep.subr.mxu0 0.0
    %95 = vmatpush1.msra.mxu0 0.0
    %96 = vmatprep.subr.mxu0 0.0
    %97 = vmatpush1.msra.mxu0 0.0
    %98 = vmatprep.subr.mxu0 0.0
    %99 = vmatpush1.msra.mxu0 0.0
    %100 = vmatprep.subr.mxu0 0.0
    %101 = vmatpush1.msra.mxu0 0.0
    %102 = vmatprep.subr.mxu0 0.0
    %103 = vmatpush1.msra.mxu0 0.0
    %104 = vmatprep.subr.mxu0 0.0
    %105 = vmatpush1.msra.mxu0 0.0
    %106 = vmatprep.subr.mxu0 0.0
    %107 = vmatpush1.msra.mxu0 0.0
    %108 = vmatprep.subr.mxu0 0.0
    %109 = vmatpush1.msra.mxu0 0.0
    %110 = vmatprep.subr.mxu0 0.0
    %111 = vmatpush1.msra.mxu0 0.0
    %112 = vmatprep.subr.mxu0 0.0
    %113 = vmatpush1.msra.mxu0 0.0
    %114 = vmatprep.subr.mxu0 0.0
    %115 = vmatpush1.msra.mxu0 0.0
    %116 = vmatprep.subr.mxu0 0.0
    %117 = vmatpush1.msra.mxu0 0.0
    %118 = vmatprep.subr.mxu0 0.0
    %119 = vmatpush1.msra.mxu0 0.0
    %120 = vmatprep.subr.mxu0 0.0
    %121 = vmatpush1.msra.mxu0 0.0
    %122 = vmatprep.subr.mxu0 0.0
    %123 = vmatpush1.msra.mxu0 0.0
    %124 = vmatprep.subr.mxu0 0.0
    %125 = vmatpush1.msra.mxu0 0.0
    %126 = vmatprep.subr.mxu0 0.0
    %127 = vmatpush1.msra.mxu0 0.0
    %128 = vmatprep.subr.mxu0 0.0
    %129 = vmatpush1.msra.mxu0 0.0
    %130 = vmatprep.subr.mxu0 0.0
    %131 = vmatpush1.msra.mxu0 0.0
    %132 = vmatprep.subr.mxu0 0.0
    %133 = vmatpush1.msra.mxu0 0.0
    %134 = vmatprep.subr.mxu0 0.0
    %135 = vmatpush1.msra.mxu0 0.0
    %136 = vmatprep.mubr.f32.mxu0 0.0
    %137 = vmatmul.mubr.f32.gmra.mrb[0].mxu0 %v49
    %v138 = vpop.f32.mrb[0].mxu0
    %v139 = vadd.f32 %v46, %v138
    %v140 = vpop.f32.mrb[0].mxu0
    %141 = vmatprep.mubr.f32.mxu0 0.0
    %142 = vmatmul.mubr.f32.gmra.mrb[0].mxu0 %v52
    %v143 = vpop.f32.mrb[0].mxu0
    %v144 = vadd.f32 %v46, %v143
    %v145 = vpop.f32.mrb[0].mxu0
    %146 = vmatprep.mubr.f32.mxu0 0.0
    %147 = vmatmul.mubr.f32.gmra.mrb[0].mxu0 %v55
    %v148 = vpop.f32.mrb[0].mxu0
    %v149 = vadd.f32 %v46, %v148
    %v150 = vpop.f32.mrb[0].mxu0
    %151 = vmatprep.mubr.f32.mxu0 0.0
    %152 = vmatmul.mubr.f32.gmra.mrb[0].mxu0 %v58
    %v153 = vpop.f32.mrb[0].mxu0
    %v154 = vadd.f32 %v46, %v153
    %v155 = vpop.f32.mrb[0].mxu0
    %156 = vmatprep.mubr.f32.mxu0 0.0
    %157 = vmatmul.mubr.f32.gmra.mrb[0].mxu0 %v61
    %v158 = vpop.f32.mrb[0].mxu0
    %v159 = vadd.f32 %v46, %v158
    %v160 = vpop.f32.mrb[0].mxu0
    %161 = vmatprep.mubr.f32.mxu0 0.0
    %162 = vmatmul.mubr.f32.gmra.mrb[0].mxu0 %v64
    %v163 = vpop.f32.mrb[0].mxu0
    %v164 = vadd.f32 %v46, %v163
    %v165 = vpop.f32.mrb[0].mxu0
    %166 = vmatprep.mubr.f32.mxu0 0.0
    %167 = vmatmul.mubr.f32.gmra.mrb[0].mxu0 %v67
    %v168 = vpop.f32.mrb[0].mxu0
    %v169 = vadd.f32 %v46, %v168
    %v170 = vpop.f32.mrb[0].mxu0
    %171 = vmatprep.mubr.f32.mxu0 0.0
    %172 = vmatmul.mubr.f32.gmra.mrb[0].mxu0 %v70
    %v173 = vpop.f32.mrb[0].mxu0
    %v174 = vadd.f32 %v46, %v173
    %v175 = vpop.f32.mrb[0].mxu0
    %176 = vdwg.mxu0
    %vm177 = vcmask 261120
    %v179 = vsel %vm177, 0.0, 0
    %181 = vmatprep.subr.mxu0 0.0
    %182 = vmatpush1.msra.mxu0 %v38
    %183 = vmatprep.subr.mxu0 0.0
    %184 = vmatpush1.msra.mxu0 %v39
    %185 = vmatprep.subr.mxu0 0.0
    %186 = vmatpush1.msra.mxu0 %v40
    %187 = vmatprep.subr.mxu0 0.0
    %188 = vmatpush1.msra.mxu0 %v41
    %189 = vmatprep.subr.mxu0 0.0
    %190 = vmatpush1.msra.mxu0 0.0
    %191 = vmatprep.subr.mxu0 0.0
    %192 = vmatpush1.msra.mxu0 0.0
    %193 = vmatprep.subr.mxu0 0.0
    %194 = vmatpush1.msra.mxu0 0.0
    %195 = vmatprep.subr.mxu0 0.0
    %196 = vmatpush1.msra.mxu0 0.0
    %197 = vmatprep.subr.mxu0 0.0
    %198 = vmatpush1.msra.mxu0 0.0
    %199 = vmatprep.subr.mxu0 0.0
    %200 = vmatpush1.msra.mxu0 0.0
    %201 = vmatprep.subr.mxu0 0.0
    %202 = vmatpush1.msra.mxu0 0.0
    %203 = vmatprep.subr.mxu0 0.0
    %204 = vmatpush1.msra.mxu0 0.0
    %205 = vmatprep.subr.mxu0 0.0
    %206 = vmatpush1.msra.mxu0 0.0
    %207 = vmatprep.subr.mxu0 0.0
    %208 = vmatpush1.msra.mxu0 0.0
    %209 = vmatprep.subr.mxu0 0.0
    %210 = vmatpush1.msra.mxu0 0.0
    %211 = vmatprep.subr.mxu0 0.0
    %212 = vmatpush1.msra.mxu0 0.0
    %213 = vmatprep.subr.mxu0 0.0
    %214 = vmatpush1.msra.mxu0 0.0
    %215 = vmatprep.subr.mxu0 0.0
    %216 = vmatpush1.msra.mxu0 0.0
    %217 = vmatprep.subr.mxu0 0.0
    %218 = vmatpush1.msra.mxu0 0.0
    %219 = vmatprep.subr.mxu0 0.0
    %220 = vmatpush1.msra.mxu0 0.0
    %221 = vmatprep.subr.mxu0 0.0
    %222 = vmatpush1.msra.mxu0 0.0
    %223 = vmatprep.subr.mxu0 0.0
    %224 = vmatpush1.msra.mxu0 0.0
    %225 = vmatprep.subr.mxu0 0.0
    %226 = vmatpush1.msra.mxu0 0.0
    %227 = vmatprep.subr.mxu0 0.0
    %228 = vmatpush1.msra.mxu0 0.0
    %229 = vmatprep.subr.mxu0 0.0
    %230 = vmatpush1.msra.mxu0 0.0
    %231 = vmatprep.subr.mxu0 0.0
    %232 = vmatpush1.msra.mxu0 0.0
    %233 = vmatprep.subr.mxu0 0.0
    %234 = vmatpush1.msra.mxu0 0.0
    %235 = vmatprep.subr.mxu0 0.0
    %236 = vmatpush1.msra.mxu0 0.0
    %237 = vmatprep.subr.mxu0 0.0
    %238 = vmatpush1.msra.mxu0 0.0
    %239 = vmatprep.subr.mxu0 0.0
    %240 = vmatpush1.msra.mxu0 0.0
    %241 = vmatprep.subr.mxu0 0.0
    %242 = vmatpush1.msra.mxu0 0.0
    %243 = vmatprep.subr.mxu0 0.0
    %244 = vmatpush1.msra.mxu0 0.0
    %245 = vmatprep.mubr.f32.mxu0 0.0
    %246 = vmatmul.mubr.f32.gmra.mrb[0].mxu0 %v179
    %v247 = vpop.f32.mrb[0].mxu0
    %v248 = vadd.f32 0.0, %v247
    %v249 = vpop.f32.mrb[0].mxu0
    %250 = vdwg.mxu0
    %v251 = vadd.f32 %v139, %v248
    %v252 = vxor.u32 %v251, 2147483648
    %v253 = vmul.f32 %v252, 1.442695
    %v254 = vpow.pop %v253
    %v255 = vadd.f32 %v254, 1.0
    %v256 = vrcp.pop %v255
    %v257 = vmul.f32 1.0, %v256
    %v258 = vtanh.pop %v251
    %v259 = vmul.f32 %v257, 0.0
    %261 = vrot.lane.b32.xlu0 %v258, 32
    %v262 = vpop.permute.xlu0 %261
    %v264 = vmul.f32 %v257, %v262
    %266 = vrot.lane.b32.xlu0 %v264, 32
    %v267 = vpop.permute.xlu0 %266
    %v269 = vadd.f32 %v259, %v267
    %v270 = vtanh.pop %v269
    %272 = vrot.lane.b32.xlu0 %v270, 32
    %v273 = vpop.permute.xlu0 %272
    %v275 = vmul.f32 %v257, %v273
    %277 = vrot.lane.b32.xlu0 %v275, 64
    %v278 = vpop.permute.xlu0 %277
    %v279 = vsel %vm177, %v278, 0
    %281 = vmatprep.subr.mxu0 0.0
    %282 = vmatpush1.msra.mxu0 %v38
    %283 = vmatprep.subr.mxu0 0.0
    %284 = vmatpush1.msra.mxu0 %v39
    %285 = vmatprep.subr.mxu0 0.0
    %286 = vmatpush1.msra.mxu0 %v40
    %287 = vmatprep.subr.mxu0 0.0
    %288 = vmatpush1.msra.mxu0 %v41
    %289 = vmatprep.subr.mxu0 0.0
    %290 = vmatpush1.msra.mxu0 0.0
    %291 = vmatprep.subr.mxu0 0.0
    %292 = vmatpush1.msra.mxu0 0.0
    %293 = vmatprep.subr.mxu0 0.0
    %294 = vmatpush1.msra.mxu0 0.0
    %295 = vmatprep.subr.mxu0 0.0
    %296 = vmatpush1.msra.mxu0 0.0
    %297 = vmatprep.subr.mxu0 0.0
    %298 = vmatpush1.msra.mxu0 0.0
    %299 = vmatprep.subr.mxu0 0.0
    %300 = vmatpush1.msra.mxu0 0.0
    %301 = vmatprep.subr.mxu0 0.0
    %302 = vmatpush1.msra.mxu0 0.0
    %303 = vmatprep.subr.mxu0 0.0
    %304 = vmatpush1.msra.mxu0 0.0
    %305 = vmatprep.subr.mxu0 0.0
    %306 = vmatpush1.msra.mxu0 0.0
    %307 = vmatprep.subr.mxu0 0.0
    %308 = vmatpush1.msra.mxu0 0.0
    %309 = vmatprep.subr.mxu0 0.0
    %310 = vmatpush1.msra.mxu0 0.0
    %311 = vmatprep.subr.mxu0 0.0
    %312 = vmatpush1.msra.mxu0 0.0
    %313 = vmatprep.subr.mxu0 0.0
    %314 = vmatpush1.msra.mxu0 0.0
    %315 = vmatprep.subr.mxu0 0.0
    %316 = vmatpush1.msra.mxu0 0.0
    %317 = vmatprep.subr.mxu0 0.0
    %318 = vmatpush1.msra.mxu0 0.0
    %319 = vmatprep.subr.mxu0 0.0
    %320 = vmatpush1.msra.mxu0 0.0
    %321 = vmatprep.subr.mxu0 0.0
    %322 = vmatpush1.msra.mxu0 0.0
    %323 = vmatprep.subr.mxu0 0.0
    %324 = vmatpush1.msra.mxu0 0.0
    %325 = vmatprep.subr.mxu0 0.0
    %326 = vmatpush1.msra.mxu0 0.0
    %327 = vmatprep.subr.mxu0 0.0
    %328 = vmatpush1.msra.mxu0 0.0
    %329 = vmatprep.subr.mxu0 0.0
    %330 = vmatpush1.msra.mxu0 0.0
    %331 = vmatprep.subr.mxu0 0.0
    %332 = vmatpush1.msra.mxu0 0.0
    %333 = vmatprep.subr.mxu0 0.0
    %334 = vmatpush1.msra.mxu0 0.0
    %335 = vmatprep.subr.mxu0 0.0
    %336 = vmatpush1.msra.mxu0 0.0
    %337 = vmatprep.subr.mxu0 0.0
    %338 = vmatpush1.msra.mxu0 0.0
    %339 = vmatprep.subr.mxu0 0.0
    %340 = vmatpush1.msra.mxu0 0.0
    %341 = vmatprep.subr.mxu0 0.0
    %342 = vmatpush1.msra.mxu0 0.0
    %343 = vmatprep.subr.mxu0 0.0
    %344 = vmatpush1.msra.mxu0 0.0
    %345 = vmatprep.mubr.f32.mxu0 0.0
    %346 = vmatmul.mubr.f32.gmra.mrb[0].mxu0 %v279
    %v347 = vpop.f32.mrb[0].mxu0
    %v348 = vadd.f32 0.0, %v347
    %v349 = vpop.f32.mrb[0].mxu0
    %350 = vdwg.mxu0
    %v351 = vadd.f32 %v144, %v348
    %v352 = vxor.u32 %v351, 2147483648
    %v353 = vmul.f32 %v352, 1.442695
    %v354 = vpow.pop %v353
    %v355 = vadd.f32 %v354, 1.0
    %v356 = vrcp.pop %v355
    %v357 = vmul.f32 1.0, %v356
    %v358 = vtanh.pop %v351
    %v359 = vmul.f32 %v357, %v269
    %361 = vrot.lane.b32.xlu0 %v358, 32
    %v362 = vpop.permute.xlu0 %361
    %v364 = vmul.f32 %v357, %v362
    %366 = vrot.lane.b32.xlu0 %v364, 32
    %v367 = vpop.permute.xlu0 %366
    %v369 = vadd.f32 %v359, %v367
    %v370 = vtanh.pop %v369
    %372 = vrot.lane.b32.xlu0 %v370, 32
    %v373 = vpop.permute.xlu0 %372
    %v375 = vmul.f32 %v357, %v373
    %377 = vrot.lane.b32.xlu0 %v375, 64
    %v378 = vpop.permute.xlu0 %377
    %v379 = vsel %vm177, %v378, 0
    %381 = vmatprep.subr.mxu0 0.0
    %382 = vmatpush1.msra.mxu0 %v38
    %383 = vmatprep.subr.mxu0 0.0
    %384 = vmatpush1.msra.mxu0 %v39
    %385 = vmatprep.subr.mxu0 0.0
    %386 = vmatpush1.msra.mxu0 %v40
    %387 = vmatprep.subr.mxu0 0.0
    %388 = vmatpush1.msra.mxu0 %v41
    %389 = vmatprep.subr.mxu0 0.0
    %390 = vmatpush1.msra.mxu0 0.0
    %391 = vmatprep.subr.mxu0 0.0
    %392 = vmatpush1.msra.mxu0 0.0
    %393 = vmatprep.subr.mxu0 0.0
    %394 = vmatpush1.msra.mxu0 0.0
    %395 = vmatprep.subr.mxu0 0.0
    %396 = vmatpush1.msra.mxu0 0.0
    %397 = vmatprep.subr.mxu0 0.0
    %398 = vmatpush1.msra.mxu0 0.0
    %399 = vmatprep.subr.mxu0 0.0
    %400 = vmatpush1.msra.mxu0 0.0
    %401 = vmatprep.subr.mxu0 0.0
    %402 = vmatpush1.msra.mxu0 0.0
    %403 = vmatprep.subr.mxu0 0.0
    %404 = vmatpush1.msra.mxu0 0.0
    %405 = vmatprep.subr.mxu0 0.0
    %406 = vmatpush1.msra.mxu0 0.0
    %407 = vmatprep.subr.mxu0 0.0
    %408 = vmatpush1.msra.mxu0 0.0
    %409 = vmatprep.subr.mxu0 0.0
    %410 = vmatpush1.msra.mxu0 0.0
    %411 = vmatprep.subr.mxu0 0.0
    %412 = vmatpush1.msra.mxu0 0.0
    %413 = vmatprep.subr.mxu0 0.0
    %414 = vmatpush1.msra.mxu0 0.0
    %415 = vmatprep.subr.mxu0 0.0
    %416 = vmatpush1.msra.mxu0 0.0
    %417 = vmatprep.subr.mxu0 0.0
    %418 = vmatpush1.msra.mxu0 0.0
    %419 = vmatprep.subr.mxu0 0.0
    %420 = vmatpush1.msra.mxu0 0.0
    %421 = vmatprep.subr.mxu0 0.0
    %422 = vmatpush1.msra.mxu0 0.0
    %423 = vmatprep.subr.mxu0 0.0
    %424 = vmatpush1.msra.mxu0 0.0
    %425 = vmatprep.subr.mxu0 0.0
    %426 = vmatpush1.msra.mxu0 0.0
    %427 = vmatprep.subr.mxu0 0.0
    %428 = vmatpush1.msra.mxu0 0.0
    %429 = vmatprep.subr.mxu0 0.0
    %430 = vmatpush1.msra.mxu0 0.0
    %431 = vmatprep.subr.mxu0 0.0
    %432 = vmatpush1.msra.mxu0 0.0
    %433 = vmatprep.subr.mxu0 0.0
    %434 = vmatpush1.msra.mxu0 0.0
    %435 = vmatprep.subr.mxu0 0.0
    %436 = vmatpush1.msra.mxu0 0.0
    %437 = vmatprep.subr.mxu0 0.0
    %438 = vmatpush1.msra.mxu0 0.0
    %439 = vmatprep.subr.mxu0 0.0
    %440 = vmatpush1.msra.mxu0 0.0
    %441 = vmatprep.subr.mxu0 0.0
    %442 = vmatpush1.msra.mxu0 0.0
    %443 = vmatprep.subr.mxu0 0.0
    %444 = vmatpush1.msra.mxu0 0.0
    %445 = vmatprep.mubr.f32.mxu0 0.0
    %446 = vmatmul.mubr.f32.gmra.mrb[0].mxu0 %v379
    %v447 = vpop.f32.mrb[0].mxu0
    %v448 = vadd.f32 0.0, %v447
    %v449 = vpop.f32.mrb[0].mxu0
    %450 = vdwg.mxu0
    %v451 = vadd.f32 %v149, %v448
    %v452 = vxor.u32 %v451, 2147483648
    %v453 = vmul.f32 %v452, 1.442695
    %v454 = vpow.pop %v453
    %v455 = vadd.f32 %v454, 1.0
    %v456 = vrcp.pop %v455
    %v457 = vmul.f32 1.0, %v456
    %v458 = vtanh.pop %v451
    %v459 = vmul.f32 %v457, %v369
    %461 = vrot.lane.b32.xlu0 %v458, 32
    %v462 = vpop.permute.xlu0 %461
    %v464 = vmul.f32 %v457, %v462
    %466 = vrot.lane.b32.xlu0 %v464, 32
    %v467 = vpop.permute.xlu0 %466
    %v469 = vadd.f32 %v459, %v467
    %v470 = vtanh.pop %v469
    %472 = vrot.lane.b32.xlu0 %v470, 32
    %v473 = vpop.permute.xlu0 %472
    %v475 = vmul.f32 %v457, %v473
    %477 = vrot.lane.b32.xlu0 %v475, 64
    %v478 = vpop.permute.xlu0 %477
    %v479 = vsel %vm177, %v478, 0
    %481 = vmatprep.subr.mxu0 0.0
    %482 = vmatpush1.msra.mxu0 %v38
    %483 = vmatprep.subr.mxu0 0.0
    %484 = vmatpush1.msra.mxu0 %v39
    %485 = vmatprep.subr.mxu0 0.0
    %486 = vmatpush1.msra.mxu0 %v40
    %487 = vmatprep.subr.mxu0 0.0
    %488 = vmatpush1.msra.mxu0 %v41
    %489 = vmatprep.subr.mxu0 0.0
    %490 = vmatpush1.msra.mxu0 0.0
    %491 = vmatprep.subr.mxu0 0.0
    %492 = vmatpush1.msra.mxu0 0.0
    %493 = vmatprep.subr.mxu0 0.0
    %494 = vmatpush1.msra.mxu0 0.0
    %495 = vmatprep.subr.mxu0 0.0
    %496 = vmatpush1.msra.mxu0 0.0
    %497 = vmatprep.subr.mxu0 0.0
    %498 = vmatpush1.msra.mxu0 0.0
    %499 = vmatprep.subr.mxu0 0.0
    %500 = vmatpush1.msra.mxu0 0.0
    %501 = vmatprep.subr.mxu0 0.0
    %502 = vmatpush1.msra.mxu0 0.0
    %503 = vmatprep.subr.mxu0 0.0
    %504 = vmatpush1.msra.mxu0 0.0
    %505 = vmatprep.subr.mxu0 0.0
    %506 = vmatpush1.msra.mxu0 0.0
    %507 = vmatprep.subr.mxu0 0.0
    %508 = vmatpush1.msra.mxu0 0.0
    %509 = vmatprep.subr.mxu0 0.0
    %510 = vmatpush1.msra.mxu0 0.0
    %511 = vmatprep.subr.mxu0 0.0
    %512 = vmatpush1.msra.mxu0 0.0
    %513 = vmatprep.subr.mxu0 0.0
    %514 = vmatpush1.msra.mxu0 0.0
    %515 = vmatprep.subr.mxu0 0.0
    %516 = vmatpush1.msra.mxu0 0.0
    %517 = vmatprep.subr.mxu0 0.0
    %518 = vmatpush1.msra.mxu0 0.0
    %519 = vmatprep.subr.mxu0 0.0
    %520 = vmatpush1.msra.mxu0 0.0
    %521 = vmatprep.subr.mxu0 0.0
    %522 = vmatpush1.msra.mxu0 0.0
    %523 = vmatprep.subr.mxu0 0.0
    %524 = vmatpush1.msra.mxu0 0.0
    %525 = vmatprep.subr.mxu0 0.0
    %526 = vmatpush1.msra.mxu0 0.0
    %527 = vmatprep.subr.mxu0 0.0
    %528 = vmatpush1.msra.mxu0 0.0
    %529 = vmatprep.subr.mxu0 0.0
    %530 = vmatpush1.msra.mxu0 0.0
    %531 = vmatprep.subr.mxu0 0.0
    %532 = vmatpush1.msra.mxu0 0.0
    %533 = vmatprep.subr.mxu0 0.0
    %534 = vmatpush1.msra.mxu0 0.0
    %535 = vmatprep.subr.mxu0 0.0
    %536 = vmatpush1.msra.mxu0 0.0
    %537 = vmatprep.subr.mxu0 0.0
    %538 = vmatpush1.msra.mxu0 0.0
    %539 = vmatprep.subr.mxu0 0.0
    %540 = vmatpush1.msra.mxu0 0.0
    %541 = vmatprep.subr.mxu0 0.0
    %542 = vmatpush1.msra.mxu0 0.0
    %543 = vmatprep.subr.mxu0 0.0
    %544 = vmatpush1.msra.mxu0 0.0
    %545 = vmatprep.mubr.f32.mxu0 0.0
    %546 = vmatmul.mubr.f32.gmra.mrb[0].mxu0 %v479
    %v547 = vpop.f32.mrb[0].mxu0
    %v548 = vadd.f32 0.0, %v547
    %v549 = vpop.f32.mrb[0].mxu0
    %550 = vdwg.mxu0
    %v551 = vadd.f32 %v154, %v548
    %v552 = vxor.u32 %v551, 2147483648
    %v553 = vmul.f32 %v552, 1.442695
    %v554 = vpow.pop %v553
    %v555 = vadd.f32 %v554, 1.0
    %v556 = vrcp.pop %v555
    %v557 = vmul.f32 1.0, %v556
    %v558 = vtanh.pop %v551
    %v559 = vmul.f32 %v557, %v469
    %561 = vrot.lane.b32.xlu0 %v558, 32
    %v562 = vpop.permute.xlu0 %561
    %v564 = vmul.f32 %v557, %v562
    %566 = vrot.lane.b32.xlu0 %v564, 32
    %v567 = vpop.permute.xlu0 %566
    %v569 = vadd.f32 %v559, %v567
    %v570 = vtanh.pop %v569
    %572 = vrot.lane.b32.xlu0 %v570, 32
    %v573 = vpop.permute.xlu0 %572
    %v575 = vmul.f32 %v557, %v573
    %577 = vrot.lane.b32.xlu0 %v575, 64
    %v578 = vpop.permute.xlu0 %577
    %v579 = vsel %vm177, %v578, 0
    %581 = vmatprep.subr.mxu0 0.0
    %582 = vmatpush1.msra.mxu0 %v38
    %583 = vmatprep.subr.mxu0 0.0
    %584 = vmatpush1.msra.mxu0 %v39
    %585 = vmatprep.subr.mxu0 0.0
    %586 = vmatpush1.msra.mxu0 %v40
    %587 = vmatprep.subr.mxu0 0.0
    %588 = vmatpush1.msra.mxu0 %v41
    %589 = vmatprep.subr.mxu0 0.0
    %590 = vmatpush1.msra.mxu0 0.0
    %591 = vmatprep.subr.mxu0 0.0
    %592 = vmatpush1.msra.mxu0 0.0
    %593 = vmatprep.subr.mxu0 0.0
    %594 = vmatpush1.msra.mxu0 0.0
    %595 = vmatprep.subr.mxu0 0.0
    %596 = vmatpush1.msra.mxu0 0.0
    %597 = vmatprep.subr.mxu0 0.0
    %598 = vmatpush1.msra.mxu0 0.0
    %599 = vmatprep.subr.mxu0 0.0
    %600 = vmatpush1.msra.mxu0 0.0
    %601 = vmatprep.subr.mxu0 0.0
    %602 = vmatpush1.msra.mxu0 0.0
    %603 = vmatprep.subr.mxu0 0.0
    %604 = vmatpush1.msra.mxu0 0.0
    %605 = vmatprep.subr.mxu0 0.0
    %606 = vmatpush1.msra.mxu0 0.0
    %607 = vmatprep.subr.mxu0 0.0
    %608 = vmatpush1.msra.mxu0 0.0
    %609 = vmatprep.subr.mxu0 0.0
    %610 = vmatpush1.msra.mxu0 0.0
    %611 = vmatprep.subr.mxu0 0.0
    %612 = vmatpush1.msra.mxu0 0.0
    %613 = vmatprep.subr.mxu0 0.0
    %614 = vmatpush1.msra.mxu0 0.0
    %615 = vmatprep.subr.mxu0 0.0
    %616 = vmatpush1.msra.mxu0 0.0
    %617 = vmatprep.subr.mxu0 0.0
    %618 = vmatpush1.msra.mxu0 0.0
    %619 = vmatprep.subr.mxu0 0.0
    %620 = vmatpush1.msra.mxu0 0.0
    %621 = vmatprep.subr.mxu0 0.0
    %622 = vmatpush1.msra.mxu0 0.0
    %623 = vmatprep.subr.mxu0 0.0
    %624 = vmatpush1.msra.mxu0 0.0
    %625 = vmatprep.subr.mxu0 0.0
    %626 = vmatpush1.msra.mxu0 0.0
    %627 = vmatprep.subr.mxu0 0.0
    %628 = vmatpush1.msra.mxu0 0.0
    %629 = vmatprep.subr.mxu0 0.0
    %630 = vmatpush1.msra.mxu0 0.0
    %631 = vmatprep.subr.mxu0 0.0
    %632 = vmatpush1.msra.mxu0 0.0
    %633 = vmatprep.subr.mxu0 0.0
    %634 = vmatpush1.msra.mxu0 0.0
    %635 = vmatprep.subr.mxu0 0.0
    %636 = vmatpush1.msra.mxu0 0.0
    %637 = vmatprep.subr.mxu0 0.0
    %638 = vmatpush1.msra.mxu0 0.0
    %639 = vmatprep.subr.mxu0 0.0
    %640 = vmatpush1.msra.mxu0 0.0
    %641 = vmatprep.subr.mxu0 0.0
    %642 = vmatpush1.msra.mxu0 0.0
    %643 = vmatprep.subr.mxu0 0.0
    %644 = vmatpush1.msra.mxu0 0.0
    %645 = vmatprep.mubr.f32.mxu0 0.0
    %646 = vmatmul.mubr.f32.gmra.mrb[0].mxu0 %v579
    %v647 = vpop.f32.mrb[0].mxu0
    %v648 = vadd.f32 0.0, %v647
    %v649 = vpop.f32.mrb[0].mxu0
    %650 = vdwg.mxu0
    %v651 = vadd.f32 %v159, %v648
    %v652 = vxor.u32 %v651, 2147483648
    %v653 = vmul.f32 %v652, 1.442695
    %v654 = vpow.pop %v653
    %v655 = vadd.f32 %v654, 1.0
    %v656 = vrcp.pop %v655
    %v657 = vmul.f32 1.0, %v656
    %v658 = vtanh.pop %v651
    %v659 = vmul.f32 %v657, %v569
    %661 = vrot.lane.b32.xlu0 %v658, 32
    %v662 = vpop.permute.xlu0 %661
    %v664 = vmul.f32 %v657, %v662
    %666 = vrot.lane.b32.xlu0 %v664, 32
    %v667 = vpop.permute.xlu0 %666
    %v669 = vadd.f32 %v659, %v667
    %v670 = vtanh.pop %v669
    %672 = vrot.lane.b32.xlu0 %v670, 32
    %v673 = vpop.permute.xlu0 %672
    %v675 = vmul.f32 %v657, %v673
    %677 = vrot.lane.b32.xlu0 %v675, 64
    %v678 = vpop.permute.xlu0 %677
    %v679 = vsel %vm177, %v678, 0
    %681 = vmatprep.subr.mxu0 0.0
    %682 = vmatpush1.msra.mxu0 %v38
    %683 = vmatprep.subr.mxu0 0.0
    %684 = vmatpush1.msra.mxu0 %v39
    %685 = vmatprep.subr.mxu0 0.0
    %686 = vmatpush1.msra.mxu0 %v40
    %687 = vmatprep.subr.mxu0 0.0
    %688 = vmatpush1.msra.mxu0 %v41
    %689 = vmatprep.subr.mxu0 0.0
    %690 = vmatpush1.msra.mxu0 0.0
    %691 = vmatprep.subr.mxu0 0.0
    %692 = vmatpush1.msra.mxu0 0.0
    %693 = vmatprep.subr.mxu0 0.0
    %694 = vmatpush1.msra.mxu0 0.0
    %695 = vmatprep.subr.mxu0 0.0
    %696 = vmatpush1.msra.mxu0 0.0
    %697 = vmatprep.subr.mxu0 0.0
    %698 = vmatpush1.msra.mxu0 0.0
    %699 = vmatprep.subr.mxu0 0.0
    %700 = vmatpush1.msra.mxu0 0.0
    %701 = vmatprep.subr.mxu0 0.0
    %702 = vmatpush1.msra.mxu0 0.0
    %703 = vmatprep.subr.mxu0 0.0
    %704 = vmatpush1.msra.mxu0 0.0
    %705 = vmatprep.subr.mxu0 0.0
    %706 = vmatpush1.msra.mxu0 0.0
    %707 = vmatprep.subr.mxu0 0.0
    %708 = vmatpush1.msra.mxu0 0.0
    %709 = vmatprep.subr.mxu0 0.0
    %710 = vmatpush1.msra.mxu0 0.0
    %711 = vmatprep.subr.mxu0 0.0
    %712 = vmatpush1.msra.mxu0 0.0
    %713 = vmatprep.subr.mxu0 0.0
    %714 = vmatpush1.msra.mxu0 0.0
    %715 = vmatprep.subr.mxu0 0.0
    %716 = vmatpush1.msra.mxu0 0.0
    %717 = vmatprep.subr.mxu0 0.0
    %718 = vmatpush1.msra.mxu0 0.0
    %719 = vmatprep.subr.mxu0 0.0
    %720 = vmatpush1.msra.mxu0 0.0
    %721 = vmatprep.subr.mxu0 0.0
    %722 = vmatpush1.msra.mxu0 0.0
    %723 = vmatprep.subr.mxu0 0.0
    %724 = vmatpush1.msra.mxu0 0.0
    %725 = vmatprep.subr.mxu0 0.0
    %726 = vmatpush1.msra.mxu0 0.0
    %727 = vmatprep.subr.mxu0 0.0
    %728 = vmatpush1.msra.mxu0 0.0
    %729 = vmatprep.subr.mxu0 0.0
    %730 = vmatpush1.msra.mxu0 0.0
    %731 = vmatprep.subr.mxu0 0.0
    %732 = vmatpush1.msra.mxu0 0.0
    %733 = vmatprep.subr.mxu0 0.0
    %734 = vmatpush1.msra.mxu0 0.0
    %735 = vmatprep.subr.mxu0 0.0
    %736 = vmatpush1.msra.mxu0 0.0
    %737 = vmatprep.subr.mxu0 0.0
    %738 = vmatpush1.msra.mxu0 0.0
    %739 = vmatprep.subr.mxu0 0.0
    %740 = vmatpush1.msra.mxu0 0.0
    %741 = vmatprep.subr.mxu0 0.0
    %742 = vmatpush1.msra.mxu0 0.0
    %743 = vmatprep.subr.mxu0 0.0
    %744 = vmatpush1.msra.mxu0 0.0
    %745 = vmatprep.mubr.f32.mxu0 0.0
    %746 = vmatmul.mubr.f32.gmra.mrb[0].mxu0 %v679
    %v747 = vpop.f32.mrb[0].mxu0
    %v748 = vadd.f32 0.0, %v747
    %v749 = vpop.f32.mrb[0].mxu0
    %750 = vdwg.mxu0
    %v751 = vadd.f32 %v164, %v748
    %v752 = vxor.u32 %v751, 2147483648
    %v753 = vmul.f32 %v752, 1.442695
    %v754 = vpow.pop %v753
    %v755 = vadd.f32 %v754, 1.0
    %v756 = vrcp.pop %v755
    %v757 = vmul.f32 1.0, %v756
    %v758 = vtanh.pop %v751
    %v759 = vmul.f32 %v757, %v669
    %761 = vrot.lane.b32.xlu0 %v758, 32
    %v762 = vpop.permute.xlu0 %761
    %v764 = vmul.f32 %v757, %v762
    %766 = vrot.lane.b32.xlu0 %v764, 32
    %v767 = vpop.permute.xlu0 %766
    %v769 = vadd.f32 %v759, %v767
    %v770 = vtanh.pop %v769
    %772 = vrot.lane.b32.xlu0 %v770, 32
    %v773 = vpop.permute.xlu0 %772
    %v775 = vmul.f32 %v757, %v773
    %777 = vrot.lane.b32.xlu0 %v775, 64
    %v778 = vpop.permute.xlu0 %777
    %v779 = vsel %vm177, %v778, 0
    %781 = vmatprep.subr.mxu0 0.0
    %782 = vmatpush1.msra.mxu0 %v38
    %783 = vmatprep.subr.mxu0 0.0
    %784 = vmatpush1.msra.mxu0 %v39
    %785 = vmatprep.subr.mxu0 0.0
    %786 = vmatpush1.msra.mxu0 %v40
    %787 = vmatprep.subr.mxu0 0.0
    %788 = vmatpush1.msra.mxu0 %v41
    %789 = vmatprep.subr.mxu0 0.0
    %790 = vmatpush1.msra.mxu0 0.0
    %791 = vmatprep.subr.mxu0 0.0
    %792 = vmatpush1.msra.mxu0 0.0
    %793 = vmatprep.subr.mxu0 0.0
    %794 = vmatpush1.msra.mxu0 0.0
    %795 = vmatprep.subr.mxu0 0.0
    %796 = vmatpush1.msra.mxu0 0.0
    %797 = vmatprep.subr.mxu0 0.0
    %798 = vmatpush1.msra.mxu0 0.0
    %799 = vmatprep.subr.mxu0 0.0
    %800 = vmatpush1.msra.mxu0 0.0
    %801 = vmatprep.subr.mxu0 0.0
    %802 = vmatpush1.msra.mxu0 0.0
    %803 = vmatprep.subr.mxu0 0.0
    %804 = vmatpush1.msra.mxu0 0.0
    %805 = vmatprep.subr.mxu0 0.0
    %806 = vmatpush1.msra.mxu0 0.0
    %807 = vmatprep.subr.mxu0 0.0
    %808 = vmatpush1.msra.mxu0 0.0
    %809 = vmatprep.subr.mxu0 0.0
    %810 = vmatpush1.msra.mxu0 0.0
    %811 = vmatprep.subr.mxu0 0.0
    %812 = vmatpush1.msra.mxu0 0.0
    %813 = vmatprep.subr.mxu0 0.0
    %814 = vmatpush1.msra.mxu0 0.0
    %815 = vmatprep.subr.mxu0 0.0
    %816 = vmatpush1.msra.mxu0 0.0
    %817 = vmatprep.subr.mxu0 0.0
    %818 = vmatpush1.msra.mxu0 0.0
    %819 = vmatprep.subr.mxu0 0.0
    %820 = vmatpush1.msra.mxu0 0.0
    %821 = vmatprep.subr.mxu0 0.0
    %822 = vmatpush1.msra.mxu0 0.0
    %823 = vmatprep.subr.mxu0 0.0
    %824 = vmatpush1.msra.mxu0 0.0
    %825 = vmatprep.subr.mxu0 0.0
    %826 = vmatpush1.msra.mxu0 0.0
    %827 = vmatprep.subr.mxu0 0.0
    %828 = vmatpush1.msra.mxu0 0.0
    %829 = vmatprep.subr.mxu0 0.0
    %830 = vmatpush1.msra.mxu0 0.0
    %831 = vmatprep.subr.mxu0 0.0
    %832 = vmatpush1.msra.mxu0 0.0
    %833 = vmatprep.subr.mxu0 0.0
    %834 = vmatpush1.msra.mxu0 0.0
    %835 = vmatprep.subr.mxu0 0.0
    %836 = vmatpush1.msra.mxu0 0.0
    %837 = vmatprep.subr.mxu0 0.0
    %838 = vmatpush1.msra.mxu0 0.0
    %839 = vmatprep.subr.mxu0 0.0
    %840 = vmatpush1.msra.mxu0 0.0
    %841 = vmatprep.subr.mxu0 0.0
    %842 = vmatpush1.msra.mxu0 0.0
    %843 = vmatprep.subr.mxu0 0.0
    %844 = vmatpush1.msra.mxu0 0.0
    %845 = vmatprep.mubr.f32.mxu0 0.0
    %846 = vmatmul.mubr.f32.gmra.mrb[0].mxu0 %v779
    %v847 = vpop.f32.mrb[0].mxu0
    %v848 = vadd.f32 0.0, %v847
    %v849 = vpop.f32.mrb[0].mxu0
    %850 = vdwg.mxu0
    %v851 = vadd.f32 %v169, %v848
    %v852 = vxor.u32 %v851, 2147483648
    %v853 = vmul.f32 %v852, 1.442695
    %v854 = vpow.pop %v853
    %v855 = vadd.f32 %v854, 1.0
    %v856 = vrcp.pop %v855
    %v857 = vmul.f32 1.0, %v856
    %v858 = vtanh.pop %v851
    %v859 = vmul.f32 %v857, %v769
    %861 = vrot.lane.b32.xlu0 %v858, 32
    %v862 = vpop.permute.xlu0 %861
    %v864 = vmul.f32 %v857, %v862
    %866 = vrot.lane.b32.xlu0 %v864, 32
    %v867 = vpop.permute.xlu0 %866
    %v869 = vadd.f32 %v859, %v867
    %v870 = vtanh.pop %v869
    %872 = vrot.lane.b32.xlu0 %v870, 32
    %v873 = vpop.permute.xlu0 %872
    %v875 = vmul.f32 %v857, %v873
    %877 = vrot.lane.b32.xlu0 %v875, 64
    %v878 = vpop.permute.xlu0 %877
    %v879 = vsel %vm177, %v878, 0
    %881 = vmatprep.subr.mxu0 0.0
    %882 = vmatpush1.msra.mxu0 %v38
    %883 = vmatprep.subr.mxu0 0.0
    %884 = vmatpush1.msra.mxu0 %v39
    %885 = vmatprep.subr.mxu0 0.0
    %886 = vmatpush1.msra.mxu0 %v40
    %887 = vmatprep.subr.mxu0 0.0
    %888 = vmatpush1.msra.mxu0 %v41
    %889 = vmatprep.subr.mxu0 0.0
    %890 = vmatpush1.msra.mxu0 0.0
    %891 = vmatprep.subr.mxu0 0.0
    %892 = vmatpush1.msra.mxu0 0.0
    %893 = vmatprep.subr.mxu0 0.0
    %894 = vmatpush1.msra.mxu0 0.0
    %895 = vmatprep.subr.mxu0 0.0
    %896 = vmatpush1.msra.mxu0 0.0
    %897 = vmatprep.subr.mxu0 0.0
    %898 = vmatpush1.msra.mxu0 0.0
    %899 = vmatprep.subr.mxu0 0.0
    %900 = vmatpush1.msra.mxu0 0.0
    %901 = vmatprep.subr.mxu0 0.0
    %902 = vmatpush1.msra.mxu0 0.0
    %903 = vmatprep.subr.mxu0 0.0
    %904 = vmatpush1.msra.mxu0 0.0
    %905 = vmatprep.subr.mxu0 0.0
    %906 = vmatpush1.msra.mxu0 0.0
    %907 = vmatprep.subr.mxu0 0.0
    %908 = vmatpush1.msra.mxu0 0.0
    %909 = vmatprep.subr.mxu0 0.0
    %910 = vmatpush1.msra.mxu0 0.0
    %911 = vmatprep.subr.mxu0 0.0
    %912 = vmatpush1.msra.mxu0 0.0
    %913 = vmatprep.subr.mxu0 0.0
    %914 = vmatpush1.msra.mxu0 0.0
    %915 = vmatprep.subr.mxu0 0.0
    %916 = vmatpush1.msra.mxu0 0.0
    %917 = vmatprep.subr.mxu0 0.0
    %918 = vmatpush1.msra.mxu0 0.0
    %919 = vmatprep.subr.mxu0 0.0
    %920 = vmatpush1.msra.mxu0 0.0
    %921 = vmatprep.subr.mxu0 0.0
    %922 = vmatpush1.msra.mxu0 0.0
    %923 = vmatprep.subr.mxu0 0.0
    %924 = vmatpush1.msra.mxu0 0.0
    %925 = vmatprep.subr.mxu0 0.0
    %926 = vmatpush1.msra.mxu0 0.0
    %927 = vmatprep.subr.mxu0 0.0
    %928 = vmatpush1.msra.mxu0 0.0
    %929 = vmatprep.subr.mxu0 0.0
    %930 = vmatpush1.msra.mxu0 0.0
    %931 = vmatprep.subr.mxu0 0.0
    %932 = vmatpush1.msra.mxu0 0.0
    %933 = vmatprep.subr.mxu0 0.0
    %934 = vmatpush1.msra.mxu0 0.0
    %935 = vmatprep.subr.mxu0 0.0
    %936 = vmatpush1.msra.mxu0 0.0
    %937 = vmatprep.subr.mxu0 0.0
    %938 = vmatpush1.msra.mxu0 0.0
    %939 = vmatprep.subr.mxu0 0.0
    %940 = vmatpush1.msra.mxu0 0.0
    %941 = vmatprep.subr.mxu0 0.0
    %942 = vmatpush1.msra.mxu0 0.0
    %943 = vmatprep.subr.mxu0 0.0
    %944 = vmatpush1.msra.mxu0 0.0
    %945 = vmatprep.mubr.f32.mxu0 0.0
    %946 = vmatmul.mubr.f32.gmra.mrb[0].mxu0 %v879
    %v947 = vpop.f32.mrb[0].mxu0
    %v948 = vadd.f32 0.0, %v947
    %v949 = vpop.f32.mrb[0].mxu0
    %950 = vdwg.mxu0
    %v951 = vadd.f32 %v174, %v948
    %v952 = vxor.u32 %v951, 2147483648
    %v953 = vmul.f32 %v952, 1.442695
    %v954 = vpow.pop %v953
    %v955 = vadd.f32 %v954, 1.0
    %v956 = vrcp.pop %v955
    %v957 = vmul.f32 1.0, %v956
    %v958 = vtanh.pop %v951
    %v959 = vmul.f32 %v957, %v869
    %961 = vrot.lane.b32.xlu0 %v958, 32
    %v962 = vpop.permute.xlu0 %961
    %v964 = vmul.f32 %v957, %v962
    %966 = vrot.lane.b32.xlu0 %v964, 32
    %v967 = vpop.permute.xlu0 %966
    %v969 = vadd.f32 %v959, %v967
    %v970 = vtanh.pop %v969
    %972 = vrot.lane.b32.xlu0 %v970, 32
    %v973 = vpop.permute.xlu0 %972
    %v975 = vmul.f32 %v957, %v973
    %v976 = vld [vmem:[#allocation2 + $0x38] sm:$0xff]
    %v977 = vld [vmem:[#allocation2 + $0x40] sm:$0xff]
    %v978 = vld [vmem:[#allocation2 + $0x48] sm:$0xff]
    %v979 = vld [vmem:[#allocation2 + $0x50] sm:$0xff]
    %v980 = vld [vmem:[#allocation2 + $0x58] sm:$0xff]
    %v981 = vld [vmem:[#allocation2 + $0x60] sm:$0xff]
    %v982 = vld [vmem:[#allocation2 + $0x68] sm:$0xff]
    %v983 = vld [vmem:[#allocation2 + $0x70] sm:$0xff]
    %v984 = vld [vmem:[#allocation2 + $0x78] sm:$0x1]
    %v985 = vlaneseq
    %v986 = vshrl.u32 %v985, 7
    %v987 = vsub.s32 0, %v986
    %v988 = vrot.slane %v984, %v987
    %990 = vrot.lane.b32.xlu0 %v975, 64
    %v991 = vpop.permute.xlu0 %990
    %v992 = vsel %vm177, %v991, 0
    %994 = vmatprep.subr.mxu0 0.0
    %995 = vmatpush1.msra.mxu0 %v976
    %996 = vmatprep.subr.mxu0 0.0
    %997 = vmatpush1.msra.mxu0 %v977
    %998 = vmatprep.subr.mxu0 0.0
    %999 = vmatpush1.msra.mxu0 %v978
    %1000 = vmatprep.subr.mxu0 0.0
    %1001 = vmatpush1.msra.mxu0 %v979
    %1002 = vmatprep.subr.mxu0 0.0
    %1003 = vmatpush1.msra.mxu0 0.0
    %1004 = vmatprep.subr.mxu0 0.0
    %1005 = vmatpush1.msra.mxu0 0.0
    %1006 = vmatprep.subr.mxu0 0.0
    %1007 = vmatpush1.msra.mxu0 0.0
    %1008 = vmatprep.subr.mxu0 0.0
    %1009 = vmatpush1.msra.mxu0 0.0
    %1010 = vmatprep.subr.mxu0 0.0
    %1011 = vmatpush1.msra.mxu0 0.0
    %1012 = vmatprep.subr.mxu0 0.0
    %1013 = vmatpush1.msra.mxu0 0.0
    %1014 = vmatprep.subr.mxu0 0.0
    %1015 = vmatpush1.msra.mxu0 0.0
    %1016 = vmatprep.subr.mxu0 0.0
    %1017 = vmatpush1.msra.mxu0 0.0
    %1018 = vmatprep.subr.mxu0 0.0
    %1019 = vmatpush1.msra.mxu0 0.0
    %1020 = vmatprep.subr.mxu0 0.0
    %1021 = vmatpush1.msra.mxu0 0.0
    %1022 = vmatprep.subr.mxu0 0.0
    %1023 = vmatpush1.msra.mxu0 0.0
    %1024 = vmatprep.subr.mxu0 0.0
    %1025 = vmatpush1.msra.mxu0 0.0
    %1026 = vmatprep.subr.mxu0 0.0
    %1027 = vmatpush1.msra.mxu0 0.0
    %1028 = vmatprep.subr.mxu0 0.0
    %1029 = vmatpush1.msra.mxu0 0.0
    %1030 = vmatprep.subr.mxu0 0.0
    %1031 = vmatpush1.msra.mxu0 0.0
    %1032 = vmatprep.subr.mxu0 0.0
    %1033 = vmatpush1.msra.mxu0 0.0
    %1034 = vmatprep.subr.mxu0 0.0
    %1035 = vmatpush1.msra.mxu0 0.0
    %1036 = vmatprep.subr.mxu0 0.0
    %1037 = vmatpush1.msra.mxu0 0.0
    %1038 = vmatprep.subr.mxu0 0.0
    %1039 = vmatpush1.msra.mxu0 0.0
    %1040 = vmatprep.subr.mxu0 0.0
    %1041 = vmatpush1.msra.mxu0 0.0
    %1042 = vmatprep.subr.mxu0 0.0
    %1043 = vmatpush1.msra.mxu0 0.0
    %1044 = vmatprep.subr.mxu0 0.0
    %1045 = vmatpush1.msra.mxu0 0.0
    %1046 = vmatprep.subr.mxu0 0.0
    %1047 = vmatpush1.msra.mxu0 0.0
    %1048 = vmatprep.subr.mxu0 0.0
    %1049 = vmatpush1.msra.mxu0 0.0
    %1050 = vmatprep.subr.mxu0 0.0
    %1051 = vmatpush1.msra.mxu0 0.0
    %1052 = vmatprep.subr.mxu0 0.0
    %1053 = vmatpush1.msra.mxu0 0.0
    %1054 = vmatprep.subr.mxu0 0.0
    %1055 = vmatpush1.msra.mxu0 0.0
    %1056 = vmatprep.subr.mxu0 0.0
    %1057 = vmatpush1.msra.mxu0 0.0
    %1058 = vmatprep.mubr.f32.mxu0 0.0
    %1059 = vmatmul.mubr.f32.gmra.mrb[0].mxu0 %v279
    %v1060 = vpop.f32.mrb[0].mxu0
    %v1061 = vadd.f32 %v988, %v1060
    %v1062 = vpop.f32.mrb[0].mxu0
    %1063 = vmatprep.mubr.f32.mxu0 0.0
    %1064 = vmatmul.mubr.f32.gmra.mrb[0].mxu0 %v379
    %v1065 = vpop.f32.mrb[0].mxu0
    %v1066 = vadd.f32 %v988, %v1065
    %v1067 = vpop.f32.mrb[0].mxu0
    %1068 = vmatprep.mubr.f32.mxu0 0.0
    %1069 = vmatmul.mubr.f32.gmra.mrb[0].mxu0 %v479
    %v1070 = vpop.f32.mrb[0].mxu0
    %v1071 = vadd.f32 %v988, %v1070
    %v1072 = vpop.f32.mrb[0].mxu0
    %1073 = vmatprep.mubr.f32.mxu0 0.0
    %1074 = vmatmul.mubr.f32.gmra.mrb[0].mxu0 %v579
    %v1075 = vpop.f32.mrb[0].mxu0
    %v1076 = vadd.f32 %v988, %v1075
    %v1077 = vpop.f32.mrb[0].mxu0
    %1078 = vmatprep.mubr.f32.mxu0 0.0
    %1079 = vmatmul.mubr.f32.gmra.mrb[0].mxu0 %v679
    %v1080 = vpop.f32.mrb[0].mxu0
    %v1081 = vadd.f32 %v988, %v1080
    %v1082 = vpop.f32.mrb[0].mxu0
    %1083 = vmatprep.mubr.f32.mxu0 0.0
    %1084 = vmatmul.mubr.f32.gmra.mrb[0].mxu0 %v779
    %v1085 = vpop.f32.mrb[0].mxu0
    %v1086 = vadd.f32 %v988, %v1085
    %v1087 = vpop.f32.mrb[0].mxu0
    %1088 = vmatprep.mubr.f32.mxu0 0.0
    %1089 = vmatmul.mubr.f32.gmra.mrb[0].mxu0 %v879
    %v1090 = vpop.f32.mrb[0].mxu0
    %v1091 = vadd.f32 %v988, %v1090
    %v1092 = vpop.f32.mrb[0].mxu0
    %1093 = vmatprep.mubr.f32.mxu0 0.0
    %1094 = vmatmul.mubr.f32.gmra.mrb[0].mxu0 %v992
    %v1095 = vpop.f32.mrb[0].mxu0
    %v1096 = vadd.f32 %v988, %v1095
    %v1097 = vpop.f32.mrb[0].mxu0
    %1098 = vdwg.mxu0
    %1099 = vmatprep.subr.mxu0 0.0
    %1100 = vmatpush1.msra.mxu0 %v980
    %1101 = vmatprep.subr.mxu0 0.0
    %1102 = vmatpush1.msra.mxu0 %v981
    %1103 = vmatprep.subr.mxu0 0.0
    %1104 = vmatpush1.msra.mxu0 %v982
    %1105 = vmatprep.subr.mxu0 0.0
    %1106 = vmatpush1.msra.mxu0 %v983
    %1107 = vmatprep.subr.mxu0 0.0
    %1108 = vmatpush1.msra.mxu0 0.0
    %1109 = vmatprep.subr.mxu0 0.0
    %1110 = vmatpush1.msra.mxu0 0.0
    %1111 = vmatprep.subr.mxu0 0.0
    %1112 = vmatpush1.msra.mxu0 0.0
    %1113 = vmatprep.subr.mxu0 0.0
    %1114 = vmatpush1.msra.mxu0 0.0
    %1115 = vmatprep.subr.mxu0 0.0
    %1116 = vmatpush1.msra.mxu0 0.0
    %1117 = vmatprep.subr.mxu0 0.0
    %1118 = vmatpush1.msra.mxu0 0.0
    %1119 = vmatprep.subr.mxu0 0.0
    %1120 = vmatpush1.msra.mxu0 0.0
    %1121 = vmatprep.subr.mxu0 0.0
    %1122 = vmatpush1.msra.mxu0 0.0
    %1123 = vmatprep.subr.mxu0 0.0
    %1124 = vmatpush1.msra.mxu0 0.0
    %1125 = vmatprep.subr.mxu0 0.0
    %1126 = vmatpush1.msra.mxu0 0.0
    %1127 = vmatprep.subr.mxu0 0.0
    %1128 = vmatpush1.msra.mxu0 0.0
    %1129 = vmatprep.subr.mxu0 0.0
    %1130 = vmatpush1.msra.mxu0 0.0
    %1131 = vmatprep.subr.mxu0 0.0
    %1132 = vmatpush1.msra.mxu0 0.0
    %1133 = vmatprep.subr.mxu0 0.0
    %1134 = vmatpush1.msra.mxu0 0.0
    %1135 = vmatprep.subr.mxu0 0.0
    %1136 = vmatpush1.msra.mxu0 0.0
    %1137 = vmatprep.subr.mxu0 0.0
    %1138 = vmatpush1.msra.mxu0 0.0
    %1139 = vmatprep.subr.mxu0 0.0
    %1140 = vmatpush1.msra.mxu0 0.0
    %1141 = vmatprep.subr.mxu0 0.0
    %1142 = vmatpush1.msra.mxu0 0.0
    %1143 = vmatprep.subr.mxu0 0.0
    %1144 = vmatpush1.msra.mxu0 0.0
    %1145 = vmatprep.subr.mxu0 0.0
    %1146 = vmatpush1.msra.mxu0 0.0
    %1147 = vmatprep.subr.mxu0 0.0
    %1148 = vmatpush1.msra.mxu0 0.0
    %1149 = vmatprep.subr.mxu0 0.0
    %1150 = vmatpush1.msra.mxu0 0.0
    %1151 = vmatprep.subr.mxu0 0.0
    %1152 = vmatpush1.msra.mxu0 0.0
    %1153 = vmatprep.subr.mxu0 0.0
    %1154 = vmatpush1.msra.mxu0 0.0
    %1155 = vmatprep.subr.mxu0 0.0
    %1156 = vmatpush1.msra.mxu0 0.0
    %1157 = vmatprep.subr.mxu0 0.0
    %1158 = vmatpush1.msra.mxu0 0.0
    %1159 = vmatprep.subr.mxu0 0.0
    %1160 = vmatpush1.msra.mxu0 0.0
    %1161 = vmatprep.subr.mxu0 0.0
    %1162 = vmatpush1.msra.mxu0 0.0
    %1163 = vmatprep.mubr.f32.mxu0 0.0
    %1164 = vmatmul.mubr.f32.gmra.mrb[0].mxu0 %v179
    %v1165 = vpop.f32.mrb[0].mxu0
    %v1166 = vadd.f32 0.0, %v1165
    %v1167 = vpop.f32.mrb[0].mxu0
    %1168 = vdwg.mxu0
    %v1169 = vadd.f32 %v1061, %v1166
    %v1170 = vxor.u32 %v1169, 2147483648
    %v1171 = vmul.f32 %v1170, 1.442695
    %v1172 = vpow.pop %v1171
    %v1173 = vadd.f32 %v1172, 1.0
    %v1174 = vrcp.pop %v1173
    %v1175 = vmul.f32 1.0, %v1174
    %v1176 = vtanh.pop %v1169
    %v1177 = vmul.f32 %v1175, 0.0
    %1179 = vrot.lane.b32.xlu0 %v1176, 32
    %v1180 = vpop.permute.xlu0 %1179
    %v1182 = vmul.f32 %v1175, %v1180
    %1184 = vrot.lane.b32.xlu0 %v1182, 32
    %v1185 = vpop.permute.xlu0 %1184
    %v1187 = vadd.f32 %v1177, %v1185
    %v1188 = vtanh.pop %v1187
    %1190 = vrot.lane.b32.xlu0 %v1188, 32
    %v1191 = vpop.permute.xlu0 %1190
    %v1193 = vmul.f32 %v1175, %v1191
    %1195 = vrot.lane.b32.xlu0 %v1193, 64
    %v1196 = vpop.permute.xlu0 %1195
    %v1197 = vsel %vm177, %v1196, 0
    %1199 = vmatprep.subr.mxu0 0.0
    %1200 = vmatpush1.msra.mxu0 %v980
    %1201 = vmatprep.subr.mxu0 0.0
    %1202 = vmatpush1.msra.mxu0 %v981
    %1203 = vmatprep.subr.mxu0 0.0
    %1204 = vmatpush1.msra.mxu0 %v982
    %1205 = vmatprep.subr.mxu0 0.0
    %1206 = vmatpush1.msra.mxu0 %v983
    %1207 = vmatprep.subr.mxu0 0.0
    %1208 = vmatpush1.msra.mxu0 0.0
    %1209 = vmatprep.subr.mxu0 0.0
    %1210 = vmatpush1.msra.mxu0 0.0
    %1211 = vmatprep.subr.mxu0 0.0
    %1212 = vmatpush1.msra.mxu0 0.0
    %1213 = vmatprep.subr.mxu0 0.0
    %1214 = vmatpush1.msra.mxu0 0.0
    %1215 = vmatprep.subr.mxu0 0.0
    %1216 = vmatpush1.msra.mxu0 0.0
    %1217 = vmatprep.subr.mxu0 0.0
    %1218 = vmatpush1.msra.mxu0 0.0
    %1219 = vmatprep.subr.mxu0 0.0
    %1220 = vmatpush1.msra.mxu0 0.0
    %1221 = vmatprep.subr.mxu0 0.0
    %1222 = vmatpush1.msra.mxu0 0.0
    %1223 = vmatprep.subr.mxu0 0.0
    %1224 = vmatpush1.msra.mxu0 0.0
    %1225 = vmatprep.subr.mxu0 0.0
    %1226 = vmatpush1.msra.mxu0 0.0
    %1227 = vmatprep.subr.mxu0 0.0
    %1228 = vmatpush1.msra.mxu0 0.0
    %1229 = vmatprep.subr.mxu0 0.0
    %1230 = vmatpush1.msra.mxu0 0.0
    %1231 = vmatprep.subr.mxu0 0.0
    %1232 = vmatpush1.msra.mxu0 0.0
    %1233 = vmatprep.subr.mxu0 0.0
    %1234 = vmatpush1.msra.mxu0 0.0
    %1235 = vmatprep.subr.mxu0 0.0
    %1236 = vmatpush1.msra.mxu0 0.0
    %1237 = vmatprep.subr.mxu0 0.0
    %1238 = vmatpush1.msra.mxu0 0.0
    %1239 = vmatprep.subr.mxu0 0.0
    %1240 = vmatpush1.msra.mxu0 0.0
    %1241 = vmatprep.subr.mxu0 0.0
    %1242 = vmatpush1.msra.mxu0 0.0
    %1243 = vmatprep.subr.mxu0 0.0
    %1244 = vmatpush1.msra.mxu0 0.0
    %1245 = vmatprep.subr.mxu0 0.0
    %1246 = vmatpush1.msra.mxu0 0.0
    %1247 = vmatprep.subr.mxu0 0.0
    %1248 = vmatpush1.msra.mxu0 0.0
    %1249 = vmatprep.subr.mxu0 0.0
    %1250 = vmatpush1.msra.mxu0 0.0
    %1251 = vmatprep.subr.mxu0 0.0
    %1252 = vmatpush1.msra.mxu0 0.0
    %1253 = vmatprep.subr.mxu0 0.0
    %1254 = vmatpush1.msra.mxu0 0.0
    %1255 = vmatprep.subr.mxu0 0.0
    %1256 = vmatpush1.msra.mxu0 0.0
    %1257 = vmatprep.subr.mxu0 0.0
    %1258 = vmatpush1.msra.mxu0 0.0
    %1259 = vmatprep.subr.mxu0 0.0
    %1260 = vmatpush1.msra.mxu0 0.0
    %1261 = vmatprep.subr.mxu0 0.0
    %1262 = vmatpush1.msra.mxu0 0.0
    %1263 = vmatprep.mubr.f32.mxu0 0.0
    %1264 = vmatmul.mubr.f32.gmra.mrb[0].mxu0 %v1197
    %v1265 = vpop.f32.mrb[0].mxu0
    %v1266 = vadd.f32 0.0, %v1265
    %v1267 = vpop.f32.mrb[0].mxu0
    %1268 = vdwg.mxu0
    %v1269 = vadd.f32 %v1066, %v1266
    %v1270 = vxor.u32 %v1269, 2147483648
    %v1271 = vmul.f32 %v1270, 1.442695
    %v1272 = vpow.pop %v1271
    %v1273 = vadd.f32 %v1272, 1.0
    %v1274 = vrcp.pop %v1273
    %v1275 = vmul.f32 1.0, %v1274
    %v1276 = vtanh.pop %v1269
    %v1277 = vmul.f32 %v1275, %v1187
    %1279 = vrot.lane.b32.xlu0 %v1276, 32
    %v1280 = vpop.permute.xlu0 %1279
    %v1282 = vmul.f32 %v1275, %v1280
    %1284 = vrot.lane.b32.xlu0 %v1282, 32
    %v1285 = vpop.permute.xlu0 %1284
    %v1287 = vadd.f32 %v1277, %v1285
    %v1288 = vtanh.pop %v1287
    %1290 = vrot.lane.b32.xlu0 %v1288, 32
    %v1291 = vpop.permute.xlu0 %1290
    %v1293 = vmul.f32 %v1275, %v1291
    %1295 = vrot.lane.b32.xlu0 %v1293, 64
    %v1296 = vpop.permute.xlu0 %1295
    %v1297 = vsel %vm177, %v1296, 0
    %1299 = vmatprep.subr.mxu0 0.0
    %1300 = vmatpush1.msra.mxu0 %v980
    %1301 = vmatprep.subr.mxu0 0.0
    %1302 = vmatpush1.msra.mxu0 %v981
    %1303 = vmatprep.subr.mxu0 0.0
    %1304 = vmatpush1.msra.mxu0 %v982
    %1305 = vmatprep.subr.mxu0 0.0
    %1306 = vmatpush1.msra.mxu0 %v983
    %1307 = vmatprep.subr.mxu0 0.0
    %1308 = vmatpush1.msra.mxu0 0.0
    %1309 = vmatprep.subr.mxu0 0.0
    %1310 = vmatpush1.msra.mxu0 0.0
    %1311 = vmatprep.subr.mxu0 0.0
    %1312 = vmatpush1.msra.mxu0 0.0
    %1313 = vmatprep.subr.mxu0 0.0
    %1314 = vmatpush1.msra.mxu0 0.0
    %1315 = vmatprep.subr.mxu0 0.0
    %1316 = vmatpush1.msra.mxu0 0.0
    %1317 = vmatprep.subr.mxu0 0.0
    %1318 = vmatpush1.msra.mxu0 0.0
    %1319 = vmatprep.subr.mxu0 0.0
    %1320 = vmatpush1.msra.mxu0 0.0
    %1321 = vmatprep.subr.mxu0 0.0
    %1322 = vmatpush1.msra.mxu0 0.0
    %1323 = vmatprep.subr.mxu0 0.0
    %1324 = vmatpush1.msra.mxu0 0.0
    %1325 = vmatprep.subr.mxu0 0.0
    %1326 = vmatpush1.msra.mxu0 0.0
    %1327 = vmatprep.subr.mxu0 0.0
    %1328 = vmatpush1.msra.mxu0 0.0
    %1329 = vmatprep.subr.mxu0 0.0
    %1330 = vmatpush1.msra.mxu0 0.0
    %1331 = vmatprep.subr.mxu0 0.0
    %1332 = vmatpush1.msra.mxu0 0.0
    %1333 = vmatprep.subr.mxu0 0.0
    %1334 = vmatpush1.msra.mxu0 0.0
    %1335 = vmatprep.subr.mxu0 0.0
    %1336 = vmatpush1.msra.mxu0 0.0
    %1337 = vmatprep.subr.mxu0 0.0
    %1338 = vmatpush1.msra.mxu0 0.0
    %1339 = vmatprep.subr.mxu0 0.0
    %1340 = vmatpush1.msra.mxu0 0.0
    %1341 = vmatprep.subr.mxu0 0.0
    %1342 = vmatpush1.msra.mxu0 0.0
    %1343 = vmatprep.subr.mxu0 0.0
    %1344 = vmatpush1.msra.mxu0 0.0
    %1345 = vmatprep.subr.mxu0 0.0
    %1346 = vmatpush1.msra.mxu0 0.0
    %1347 = vmatprep.subr.mxu0 0.0
    %1348 = vmatpush1.msra.mxu0 0.0
    %1349 = vmatprep.subr.mxu0 0.0
    %1350 = vmatpush1.msra.mxu0 0.0
    %1351 = vmatprep.subr.mxu0 0.0
    %1352 = vmatpush1.msra.mxu0 0.0
    %1353 = vmatprep.subr.mxu0 0.0
    %1354 = vmatpush1.msra.mxu0 0.0
    %1355 = vmatprep.subr.mxu0 0.0
    %1356 = vmatpush1.msra.mxu0 0.0
    %1357 = vmatprep.subr.mxu0 0.0
    %1358 = vmatpush1.msra.mxu0 0.0
    %1359 = vmatprep.subr.mxu0 0.0
    %1360 = vmatpush1.msra.mxu0 0.0
    %1361 = vmatprep.subr.mxu0 0.0
    %1362 = vmatpush1.msra.mxu0 0.0
    %1363 = vmatprep.mubr.f32.mxu0 0.0
    %1364 = vmatmul.mubr.f32.gmra.mrb[0].mxu0 %v1297
    %v1365 = vpop.f32.mrb[0].mxu0
    %v1366 = vadd.f32 0.0, %v1365
    %v1367 = vpop.f32.mrb[0].mxu0
    %1368 = vdwg.mxu0
    %v1369 = vadd.f32 %v1071, %v1366
    %v1370 = vxor.u32 %v1369, 2147483648
    %v1371 = vmul.f32 %v1370, 1.442695
    %v1372 = vpow.pop %v1371
    %v1373 = vadd.f32 %v1372, 1.0
    %v1374 = vrcp.pop %v1373
    %v1375 = vmul.f32 1.0, %v1374
    %v1376 = vtanh.pop %v1369
    %v1377 = vmul.f32 %v1375, %v1287
    %1379 = vrot.lane.b32.xlu0 %v1376, 32
    %v1380 = vpop.permute.xlu0 %1379
    %v1382 = vmul.f32 %v1375, %v1380
    %1384 = vrot.lane.b32.xlu0 %v1382, 32
    %v1385 = vpop.permute.xlu0 %1384
    %v1387 = vadd.f32 %v1377, %v1385
    %v1388 = vtanh.pop %v1387
    %1390 = vrot.lane.b32.xlu0 %v1388, 32
    %v1391 = vpop.permute.xlu0 %1390
    %v1393 = vmul.f32 %v1375, %v1391
    %1395 = vrot.lane.b32.xlu0 %v1393, 64
    %v1396 = vpop.permute.xlu0 %1395
    %v1397 = vsel %vm177, %v1396, 0
    %1399 = vmatprep.subr.mxu0 0.0
    %1400 = vmatpush1.msra.mxu0 %v980
    %1401 = vmatprep.subr.mxu0 0.0
    %1402 = vmatpush1.msra.mxu0 %v981
    %1403 = vmatprep.subr.mxu0 0.0
    %1404 = vmatpush1.msra.mxu0 %v982
    %1405 = vmatprep.subr.mxu0 0.0
    %1406 = vmatpush1.msra.mxu0 %v983
    %1407 = vmatprep.subr.mxu0 0.0
    %1408 = vmatpush1.msra.mxu0 0.0
    %1409 = vmatprep.subr.mxu0 0.0
    %1410 = vmatpush1.msra.mxu0 0.0
    %1411 = vmatprep.subr.mxu0 0.0
    %1412 = vmatpush1.msra.mxu0 0.0
    %1413 = vmatprep.subr.mxu0 0.0
    %1414 = vmatpush1.msra.mxu0 0.0
    %1415 = vmatprep.subr.mxu0 0.0
    %1416 = vmatpush1.msra.mxu0 0.0
    %1417 = vmatprep.subr.mxu0 0.0
    %1418 = vmatpush1.msra.mxu0 0.0
    %1419 = vmatprep.subr.mxu0 0.0
    %1420 = vmatpush1.msra.mxu0 0.0
    %1421 = vmatprep.subr.mxu0 0.0
    %1422 = vmatpush1.msra.mxu0 0.0
    %1423 = vmatprep.subr.mxu0 0.0
    %1424 = vmatpush1.msra.mxu0 0.0
    %1425 = vmatprep.subr.mxu0 0.0
    %1426 = vmatpush1.msra.mxu0 0.0
    %1427 = vmatprep.subr.mxu0 0.0
    %1428 = vmatpush1.msra.mxu0 0.0
    %1429 = vmatprep.subr.mxu0 0.0
    %1430 = vmatpush1.msra.mxu0 0.0
    %1431 = vmatprep.subr.mxu0 0.0
    %1432 = vmatpush1.msra.mxu0 0.0
    %1433 = vmatprep.subr.mxu0 0.0
    %1434 = vmatpush1.msra.mxu0 0.0
    %1435 = vmatprep.subr.mxu0 0.0
    %1436 = vmatpush1.msra.mxu0 0.0
    %1437 = vmatprep.subr.mxu0 0.0
    %1438 = vmatpush1.msra.mxu0 0.0
    %1439 = vmatprep.subr.mxu0 0.0
    %1440 = vmatpush1.msra.mxu0 0.0
    %1441 = vmatprep.subr.mxu0 0.0
    %1442 = vmatpush1.msra.mxu0 0.0
    %1443 = vmatprep.subr.mxu0 0.0
    %1444 = vmatpush1.msra.mxu0 0.0
    %1445 = vmatprep.subr.mxu0 0.0
    %1446 = vmatpush1.msra.mxu0 0.0
    %1447 = vmatprep.subr.mxu0 0.0
    %1448 = vmatpush1.msra.mxu0 0.0
    %1449 = vmatprep.subr.mxu0 0.0
    %1450 = vmatpush1.msra.mxu0 0.0
    %1451 = vmatprep.subr.mxu0 0.0
    %1452 = vmatpush1.msra.mxu0 0.0
    %1453 = vmatprep.subr.mxu0 0.0
    %1454 = vmatpush1.msra.mxu0 0.0
    %1455 = vmatprep.subr.mxu0 0.0
    %1456 = vmatpush1.msra.mxu0 0.0
    %1457 = vmatprep.subr.mxu0 0.0
    %1458 = vmatpush1.msra.mxu0 0.0
    %1459 = vmatprep.subr.mxu0 0.0
    %1460 = vmatpush1.msra.mxu0 0.0
    %1461 = vmatprep.subr.mxu0 0.0
    %1462 = vmatpush1.msra.mxu0 0.0
    %1463 = vmatprep.mubr.f32.mxu0 0.0
    %1464 = vmatmul.mubr.f32.gmra.mrb[0].mxu0 %v1397
    %v1465 = vpop.f32.mrb[0].mxu0
    %v1466 = vadd.f32 0.0, %v1465
    %v1467 = vpop.f32.mrb[0].mxu0
    %1468 = vdwg.mxu0
    %v1469 = vadd.f32 %v1076, %v1466
    %v1470 = vxor.u32 %v1469, 2147483648
    %v1471 = vmul.f32 %v1470, 1.442695
    %v1472 = vpow.pop %v1471
    %v1473 = vadd.f32 %v1472, 1.0
    %v1474 = vrcp.pop %v1473
    %v1475 = vmul.f32 1.0, %v1474
    %v1476 = vtanh.pop %v1469
    %v1477 = vmul.f32 %v1475, %v1387
    %1479 = vrot.lane.b32.xlu0 %v1476, 32
    %v1480 = vpop.permute.xlu0 %1479
    %v1482 = vmul.f32 %v1475, %v1480
    %1484 = vrot.lane.b32.xlu0 %v1482, 32
    %v1485 = vpop.permute.xlu0 %1484
    %v1487 = vadd.f32 %v1477, %v1485
    %v1488 = vtanh.pop %v1487
    %1490 = vrot.lane.b32.xlu0 %v1488, 32
    %v1491 = vpop.permute.xlu0 %1490
    %v1493 = vmul.f32 %v1475, %v1491
    %1495 = vrot.lane.b32.xlu0 %v1493, 64
    %v1496 = vpop.permute.xlu0 %1495
    %v1497 = vsel %vm177, %v1496, 0
    %1499 = vmatprep.subr.mxu0 0.0
    %1500 = vmatpush1.msra.mxu0 %v980
    %1501 = vmatprep.subr.mxu0 0.0
    %1502 = vmatpush1.msra.mxu0 %v981
    %1503 = vmatprep.subr.mxu0 0.0
    %1504 = vmatpush1.msra.mxu0 %v982
    %1505 = vmatprep.subr.mxu0 0.0
    %1506 = vmatpush1.msra.mxu0 %v983
    %1507 = vmatprep.subr.mxu0 0.0
    %1508 = vmatpush1.msra.mxu0 0.0
    %1509 = vmatprep.subr.mxu0 0.0
    %1510 = vmatpush1.msra.mxu0 0.0
    %1511 = vmatprep.subr.mxu0 0.0
    %1512 = vmatpush1.msra.mxu0 0.0
    %1513 = vmatprep.subr.mxu0 0.0
    %1514 = vmatpush1.msra.mxu0 0.0
    %1515 = vmatprep.subr.mxu0 0.0
    %1516 = vmatpush1.msra.mxu0 0.0
    %1517 = vmatprep.subr.mxu0 0.0
    %1518 = vmatpush1.msra.mxu0 0.0
    %1519 = vmatprep.subr.mxu0 0.0
    %1520 = vmatpush1.msra.mxu0 0.0
    %1521 = vmatprep.subr.mxu0 0.0
    %1522 = vmatpush1.msra.mxu0 0.0
    %1523 = vmatprep.subr.mxu0 0.0
    %1524 = vmatpush1.msra.mxu0 0.0
    %1525 = vmatprep.subr.mxu0 0.0
    %1526 = vmatpush1.msra.mxu0 0.0
    %1527 = vmatprep.subr.mxu0 0.0
    %1528 = vmatpush1.msra.mxu0 0.0
    %1529 = vmatprep.subr.mxu0 0.0
    %1530 = vmatpush1.msra.mxu0 0.0
    %1531 = vmatprep.subr.mxu0 0.0
    %1532 = vmatpush1.msra.mxu0 0.0
    %1533 = vmatprep.subr.mxu0 0.0
    %1534 = vmatpush1.msra.mxu0 0.0
    %1535 = vmatprep.subr.mxu0 0.0
    %1536 = vmatpush1.msra.mxu0 0.0
    %1537 = vmatprep.subr.mxu0 0.0
    %1538 = vmatpush1.msra.mxu0 0.0
    %1539 = vmatprep.subr.mxu0 0.0
    %1540 = vmatpush1.msra.mxu0 0.0
    %1541 = vmatprep.subr.mxu0 0.0
    %1542 = vmatpush1.msra.mxu0 0.0
    %1543 = vmatprep.subr.mxu0 0.0
    %1544 = vmatpush1.msra.mxu0 0.0
    %1545 = vmatprep.subr.mxu0 0.0
    %1546 = vmatpush1.msra.mxu0 0.0
    %1547 = vmatprep.subr.mxu0 0.0
    %1548 = vmatpush1.msra.mxu0 0.0
    %1549 = vmatprep.subr.mxu0 0.0
    %1550 = vmatpush1.msra.mxu0 0.0
    %1551 = vmatprep.subr.mxu0 0.0
    %1552 = vmatpush1.msra.mxu0 0.0
    %1553 = vmatprep.subr.mxu0 0.0
    %1554 = vmatpush1.msra.mxu0 0.0
    %1555 = vmatprep.subr.mxu0 0.0
    %1556 = vmatpush1.msra.mxu0 0.0
    %1557 = vmatprep.subr.mxu0 0.0
    %1558 = vmatpush1.msra.mxu0 0.0
    %1559 = vmatprep.subr.mxu0 0.0
    %1560 = vmatpush1.msra.mxu0 0.0
    %1561 = vmatprep.subr.mxu0 0.0
    %1562 = vmatpush1.msra.mxu0 0.0
    %1563 = vmatprep.mubr.f32.mxu0 0.0
    %1564 = vmatmul.mubr.f32.gmra.mrb[0].mxu0 %v1497
    %v1565 = vpop.f32.mrb[0].mxu0
    %v1566 = vadd.f32 0.0, %v1565
    %v1567 = vpop.f32.mrb[0].mxu0
    %1568 = vdwg.mxu0
    %v1569 = vadd.f32 %v1081, %v1566
    %v1570 = vxor.u32 %v1569, 2147483648
    %v1571 = vmul.f32 %v1570, 1.442695
    %v1572 = vpow.pop %v1571
    %v1573 = vadd.f32 %v1572, 1.0
    %v1574 = vrcp.pop %v1573
    %v1575 = vmul.f32 1.0, %v1574
    %v1576 = vtanh.pop %v1569
    %v1577 = vmul.f32 %v1575, %v1487
    %1579 = vrot.lane.b32.xlu0 %v1576, 32
    %v1580 = vpop.permute.xlu0 %1579
    %v1582 = vmul.f32 %v1575, %v1580
    %1584 = vrot.lane.b32.xlu0 %v1582, 32
    %v1585 = vpop.permute.xlu0 %1584
    %v1587 = vadd.f32 %v1577, %v1585
    %v1588 = vtanh.pop %v1587
    %1590 = vrot.lane.b32.xlu0 %v1588, 32
    %v1591 = vpop.permute.xlu0 %1590
    %v1593 = vmul.f32 %v1575, %v1591
    %1595 = vrot.lane.b32.xlu0 %v1593, 64
    %v1596 = vpop.permute.xlu0 %1595
    %v1597 = vsel %vm177, %v1596, 0
    %1599 = vmatprep.subr.mxu0 0.0
    %1600 = vmatpush1.msra.mxu0 %v980
    %1601 = vmatprep.subr.mxu0 0.0
    %1602 = vmatpush1.msra.mxu0 %v981
    %1603 = vmatprep.subr.mxu0 0.0
    %1604 = vmatpush1.msra.mxu0 %v982
    %1605 = vmatprep.subr.mxu0 0.0
    %1606 = vmatpush1.msra.mxu0 %v983
    %1607 = vmatprep.subr.mxu0 0.0
    %1608 = vmatpush1.msra.mxu0 0.0
    %1609 = vmatprep.subr.mxu0 0.0
    %1610 = vmatpush1.msra.mxu0 0.0
    %1611 = vmatprep.subr.mxu0 0.0
    %1612 = vmatpush1.msra.mxu0 0.0
    %1613 = vmatprep.subr.mxu0 0.0
    %1614 = vmatpush1.msra.mxu0 0.0
    %1615 = vmatprep.subr.mxu0 0.0
    %1616 = vmatpush1.msra.mxu0 0.0
    %1617 = vmatprep.subr.mxu0 0.0
    %1618 = vmatpush1.msra.mxu0 0.0
    %1619 = vmatprep.subr.mxu0 0.0
    %1620 = vmatpush1.msra.mxu0 0.0
    %1621 = vmatprep.subr.mxu0 0.0
    %1622 = vmatpush1.msra.mxu0 0.0
    %1623 = vmatprep.subr.mxu0 0.0
    %1624 = vmatpush1.msra.mxu0 0.0
    %1625 = vmatprep.subr.mxu0 0.0
    %1626 = vmatpush1.msra.mxu0 0.0
    %1627 = vmatprep.subr.mxu0 0.0
    %1628 = vmatpush1.msra.mxu0 0.0
    %1629 = vmatprep.subr.mxu0 0.0
    %1630 = vmatpush1.msra.mxu0 0.0
    %1631 = vmatprep.subr.mxu0 0.0
    %1632 = vmatpush1.msra.mxu0 0.0
    %1633 = vmatprep.subr.mxu0 0.0
    %1634 = vmatpush1.msra.mxu0 0.0
    %1635 = vmatprep.subr.mxu0 0.0
    %1636 = vmatpush1.msra.mxu0 0.0
    %1637 = vmatprep.subr.mxu0 0.0
    %1638 = vmatpush1.msra.mxu0 0.0
    %1639 = vmatprep.subr.mxu0 0.0
    %1640 = vmatpush1.msra.mxu0 0.0
    %1641 = vmatprep.subr.mxu0 0.0
    %1642 = vmatpush1.msra.mxu0 0.0
    %1643 = vmatprep.subr.mxu0 0.0
    %1644 = vmatpush1.msra.mxu0 0.0
    %1645 = vmatprep.subr.mxu0 0.0
    %1646 = vmatpush1.msra.mxu0 0.0
    %1647 = vmatprep.subr.mxu0 0.0
    %1648 = vmatpush1.msra.mxu0 0.0
    %1649 = vmatprep.subr.mxu0 0.0
    %1650 = vmatpush1.msra.mxu0 0.0
    %1651 = vmatprep.subr.mxu0 0.0
    %1652 = vmatpush1.msra.mxu0 0.0
    %1653 = vmatprep.subr.mxu0 0.0
    %1654 = vmatpush1.msra.mxu0 0.0
    %1655 = vmatprep.subr.mxu0 0.0
    %1656 = vmatpush1.msra.mxu0 0.0
    %1657 = vmatprep.subr.mxu0 0.0
    %1658 = vmatpush1.msra.mxu0 0.0
    %1659 = vmatprep.subr.mxu0 0.0
    %1660 = vmatpush1.msra.mxu0 0.0
    %1661 = vmatprep.subr.mxu0 0.0
    %1662 = vmatpush1.msra.mxu0 0.0
    %1663 = vmatprep.mubr.f32.mxu0 0.0
    %1664 = vmatmul.mubr.f32.gmra.mrb[0].mxu0 %v1597
    %v1665 = vpop.f32.mrb[0].mxu0
    %v1666 = vadd.f32 0.0, %v1665
    %v1667 = vpop.f32.mrb[0].mxu0
    %1668 = vdwg.mxu0
    %v1669 = vadd.f32 %v1086, %v1666
    %v1670 = vxor.u32 %v1669, 2147483648
    %v1671 = vmul.f32 %v1670, 1.442695
    %v1672 = vpow.pop %v1671
    %v1673 = vadd.f32 %v1672, 1.0
    %v1674 = vrcp.pop %v1673
    %v1675 = vmul.f32 1.0, %v1674
    %v1676 = vtanh.pop %v1669
    %v1677 = vmul.f32 %v1675, %v1587
    %1679 = vrot.lane.b32.xlu0 %v1676, 32
    %v1680 = vpop.permute.xlu0 %1679
    %v1682 = vmul.f32 %v1675, %v1680
    %1684 = vrot.lane.b32.xlu0 %v1682, 32
    %v1685 = vpop.permute.xlu0 %1684
    %v1687 = vadd.f32 %v1677, %v1685
    %v1688 = vtanh.pop %v1687
    %1690 = vrot.lane.b32.xlu0 %v1688, 32
    %v1691 = vpop.permute.xlu0 %1690
    %v1693 = vmul.f32 %v1675, %v1691
    %1695 = vrot.lane.b32.xlu0 %v1693, 64
    %v1696 = vpop.permute.xlu0 %1695
    %v1697 = vsel %vm177, %v1696, 0
    %1699 = vmatprep.subr.mxu0 0.0
    %1700 = vmatpush1.msra.mxu0 %v980
    %1701 = vmatprep.subr.mxu0 0.0
    %1702 = vmatpush1.msra.mxu0 %v981
    %1703 = vmatprep.subr.mxu0 0.0
    %1704 = vmatpush1.msra.mxu0 %v982
    %1705 = vmatprep.subr.mxu0 0.0
    %1706 = vmatpush1.msra.mxu0 %v983
    %1707 = vmatprep.subr.mxu0 0.0
    %1708 = vmatpush1.msra.mxu0 0.0
    %1709 = vmatprep.subr.mxu0 0.0
    %1710 = vmatpush1.msra.mxu0 0.0
    %1711 = vmatprep.subr.mxu0 0.0
    %1712 = vmatpush1.msra.mxu0 0.0
    %1713 = vmatprep.subr.mxu0 0.0
    %1714 = vmatpush1.msra.mxu0 0.0
    %1715 = vmatprep.subr.mxu0 0.0
    %1716 = vmatpush1.msra.mxu0 0.0
    %1717 = vmatprep.subr.mxu0 0.0
    %1718 = vmatpush1.msra.mxu0 0.0
    %1719 = vmatprep.subr.mxu0 0.0
    %1720 = vmatpush1.msra.mxu0 0.0
    %1721 = vmatprep.subr.mxu0 0.0
    %1722 = vmatpush1.msra.mxu0 0.0
    %1723 = vmatprep.subr.mxu0 0.0
    %1724 = vmatpush1.msra.mxu0 0.0
    %1725 = vmatprep.subr.mxu0 0.0
    %1726 = vmatpush1.msra.mxu0 0.0
    %1727 = vmatprep.subr.mxu0 0.0
    %1728 = vmatpush1.msra.mxu0 0.0
    %1729 = vmatprep.subr.mxu0 0.0
    %1730 = vmatpush1.msra.mxu0 0.0
    %1731 = vmatprep.subr.mxu0 0.0
    %1732 = vmatpush1.msra.mxu0 0.0
    %1733 = vmatprep.subr.mxu0 0.0
    %1734 = vmatpush1.msra.mxu0 0.0
    %1735 = vmatprep.subr.mxu0 0.0
    %1736 = vmatpush1.msra.mxu0 0.0
    %1737 = vmatprep.subr.mxu0 0.0
    %1738 = vmatpush1.msra.mxu0 0.0
    %1739 = vmatprep.subr.mxu0 0.0
    %1740 = vmatpush1.msra.mxu0 0.0
    %1741 = vmatprep.subr.mxu0 0.0
    %1742 = vmatpush1.msra.mxu0 0.0
    %1743 = vmatprep.subr.mxu0 0.0
    %1744 = vmatpush1.msra.mxu0 0.0
    %1745 = vmatprep.subr.mxu0 0.0
    %1746 = vmatpush1.msra.mxu0 0.0
    %1747 = vmatprep.subr.mxu0 0.0
    %1748 = vmatpush1.msra.mxu0 0.0
    %1749 = vmatprep.subr.mxu0 0.0
    %1750 = vmatpush1.msra.mxu0 0.0
    %1751 = vmatprep.subr.mxu0 0.0
    %1752 = vmatpush1.msra.mxu0 0.0
    %1753 = vmatprep.subr.mxu0 0.0
    %1754 = vmatpush1.msra.mxu0 0.0
    %1755 = vmatprep.subr.mxu0 0.0
    %1756 = vmatpush1.msra.mxu0 0.0
    %1757 = vmatprep.subr.mxu0 0.0
    %1758 = vmatpush1.msra.mxu0 0.0
    %1759 = vmatprep.subr.mxu0 0.0
    %1760 = vmatpush1.msra.mxu0 0.0
    %1761 = vmatprep.subr.mxu0 0.0
    %1762 = vmatpush1.msra.mxu0 0.0
    %1763 = vmatprep.mubr.f32.mxu0 0.0
    %1764 = vmatmul.mubr.f32.gmra.mrb[0].mxu0 %v1697
    %v1765 = vpop.f32.mrb[0].mxu0
    %v1766 = vadd.f32 0.0, %v1765
    %v1767 = vpop.f32.mrb[0].mxu0
    %1768 = vdwg.mxu0
    %v1769 = vadd.f32 %v1091, %v1766
    %v1770 = vxor.u32 %v1769, 2147483648
    %v1771 = vmul.f32 %v1770, 1.442695
    %v1772 = vpow.pop %v1771
    %v1773 = vadd.f32 %v1772, 1.0
    %v1774 = vrcp.pop %v1773
    %v1775 = vmul.f32 1.0, %v1774
    %v1776 = vtanh.pop %v1769
    %v1777 = vmul.f32 %v1775, %v1687
    %1779 = vrot.lane.b32.xlu0 %v1776, 32
    %v1780 = vpop.permute.xlu0 %1779
    %v1782 = vmul.f32 %v1775, %v1780
    %1784 = vrot.lane.b32.xlu0 %v1782, 32
    %v1785 = vpop.permute.xlu0 %1784
    %v1787 = vadd.f32 %v1777, %v1785
    %v1788 = vtanh.pop %v1787
    %1790 = vrot.lane.b32.xlu0 %v1788, 32
    %v1791 = vpop.permute.xlu0 %1790
    %v1793 = vmul.f32 %v1775, %v1791
    %1795 = vrot.lane.b32.xlu0 %v1793, 64
    %v1796 = vpop.permute.xlu0 %1795
    %v1797 = vsel %vm177, %v1796, 0
    %1799 = vmatprep.subr.mxu0 0.0
    %1800 = vmatpush1.msra.mxu0 %v980
    %1801 = vmatprep.subr.mxu0 0.0
    %1802 = vmatpush1.msra.mxu0 %v981
    %1803 = vmatprep.subr.mxu0 0.0
    %1804 = vmatpush1.msra.mxu0 %v982
    %1805 = vmatprep.subr.mxu0 0.0
    %1806 = vmatpush1.msra.mxu0 %v983
    %1807 = vmatprep.subr.mxu0 0.0
    %1808 = vmatpush1.msra.mxu0 0.0
    %1809 = vmatprep.subr.mxu0 0.0
    %1810 = vmatpush1.msra.mxu0 0.0
    %1811 = vmatprep.subr.mxu0 0.0
    %1812 = vmatpush1.msra.mxu0 0.0
    %1813 = vmatprep.subr.mxu0 0.0
    %1814 = vmatpush1.msra.mxu0 0.0
    %1815 = vmatprep.subr.mxu0 0.0
    %1816 = vmatpush1.msra.mxu0 0.0
    %1817 = vmatprep.subr.mxu0 0.0
    %1818 = vmatpush1.msra.mxu0 0.0
    %1819 = vmatprep.subr.mxu0 0.0
    %1820 = vmatpush1.msra.mxu0 0.0
    %1821 = vmatprep.subr.mxu0 0.0
    %1822 = vmatpush1.msra.mxu0 0.0
    %1823 = vmatprep.subr.mxu0 0.0
    %1824 = vmatpush1.msra.mxu0 0.0
    %1825 = vmatprep.subr.mxu0 0.0
    %1826 = vmatpush1.msra.mxu0 0.0
    %1827 = vmatprep.subr.mxu0 0.0
    %1828 = vmatpush1.msra.mxu0 0.0
    %1829 = vmatprep.subr.mxu0 0.0
    %1830 = vmatpush1.msra.mxu0 0.0
    %1831 = vmatprep.subr.mxu0 0.0
    %1832 = vmatpush1.msra.mxu0 0.0
    %1833 = vmatprep.subr.mxu0 0.0
    %1834 = vmatpush1.msra.mxu0 0.0
    %1835 = vmatprep.subr.mxu0 0.0
    %1836 = vmatpush1.msra.mxu0 0.0
    %1837 = vmatprep.subr.mxu0 0.0
    %1838 = vmatpush1.msra.mxu0 0.0
    %1839 = vmatprep.subr.mxu0 0.0
    %1840 = vmatpush1.msra.mxu0 0.0
    %1841 = vmatprep.subr.mxu0 0.0
    %1842 = vmatpush1.msra.mxu0 0.0
    %1843 = vmatprep.subr.mxu0 0.0
    %1844 = vmatpush1.msra.mxu0 0.0
    %1845 = vmatprep.subr.mxu0 0.0
    %1846 = vmatpush1.msra.mxu0 0.0
    %1847 = vmatprep.subr.mxu0 0.0
    %1848 = vmatpush1.msra.mxu0 0.0
    %1849 = vmatprep.subr.mxu0 0.0
    %1850 = vmatpush1.msra.mxu0 0.0
    %1851 = vmatprep.subr.mxu0 0.0
    %1852 = vmatpush1.msra.mxu0 0.0
    %1853 = vmatprep.subr.mxu0 0.0
    %1854 = vmatpush1.msra.mxu0 0.0
    %1855 = vmatprep.subr.mxu0 0.0
    %1856 = vmatpush1.msra.mxu0 0.0
    %1857 = vmatprep.subr.mxu0 0.0
    %1858 = vmatpush1.msra.mxu0 0.0
    %1859 = vmatprep.subr.mxu0 0.0
    %1860 = vmatpush1.msra.mxu0 0.0
    %1861 = vmatprep.subr.mxu0 0.0
    %1862 = vmatpush1.msra.mxu0 0.0
    %1863 = vmatprep.mubr.f32.mxu0 0.0
    %1864 = vmatmul.mubr.f32.gmra.mrb[0].mxu0 %v1797
    %v1865 = vpop.f32.mrb[0].mxu0
    %v1866 = vadd.f32 0.0, %v1865
    %v1867 = vpop.f32.mrb[0].mxu0
    %1868 = vdwg.mxu0
    %v1869 = vadd.f32 %v1096, %v1866
    %v1870 = vxor.u32 %v1869, 2147483648
    %v1871 = vmul.f32 %v1870, 1.442695
    %v1872 = vpow.pop %v1871
    %v1873 = vadd.f32 %v1872, 1.0
    %v1874 = vrcp.pop %v1873
    %v1875 = vmul.f32 1.0, %v1874
    %v1876 = vtanh.pop %v1869
    %v1877 = vmul.f32 %v1875, %v1787
    %1879 = vrot.lane.b32.xlu0 %v1876, 32
    %v1880 = vpop.permute.xlu0 %1879
    %v1882 = vmul.f32 %v1875, %v1880
    %1884 = vrot.lane.b32.xlu0 %v1882, 32
    %v1885 = vpop.permute.xlu0 %1884
    %v1887 = vadd.f32 %v1877, %v1885
    %v1888 = vtanh.pop %v1887
    %1890 = vrot.lane.b32.xlu0 %v1888, 32
    %v1891 = vpop.permute.xlu0 %1890
    %v1893 = vmul.f32 %v1875, %v1891
    %v1894 = vld [vmem:[#allocation2 + $0x80] sm:$0xff]
    %v1895 = vld [vmem:[#allocation2 + $0x88] sm:$0xff]
    %v1896 = vld [vmem:[#allocation2 + $0x90] sm:$0xff]
    %v1897 = vld [vmem:[#allocation2 + $0x98] sm:$0xff]
    %v1898 = vld [vmem:[#allocation2 + $0xa0] sm:$0xf]
    %v1899 = vld [vmem:[#allocation2 + $0xa8] sm:$0x1]
    %v1900 = vld [vmem:[#allocation2 + $0xb0] sm:$0x1]
    %v1901 = vld [vmem:[#allocation2 + $0xb8] sm:$0x1]
    %v1902 = vld [vmem:[%s1] sm:$0xff]
    %vm1903 = vcmask 31744
    %v1905 = vsel %vm1903, %v1902, 0
    %vm1907 = vcmask 1043456
    %v1909 = vsel %vm1907, %v1898, 0
    %1911 = vmatprep.subr.mxu0 0.0
    %1912 = vmatpush1.msra.mxu0 %v1909
    %1913 = vmatprep.subr.mxu0 0.0
    %1914 = vmatpush1.msra.mxu0 0.0
    %1915 = vmatprep.subr.mxu0 0.0
    %1916 = vmatpush1.msra.mxu0 0.0
    %1917 = vmatprep.subr.mxu0 0.0
    %1918 = vmatpush1.msra.mxu0 0.0
    %1919 = vmatprep.subr.mxu0 0.0
    %1920 = vmatpush1.msra.mxu0 0.0
    %1921 = vmatprep.subr.mxu0 0.0
    %1922 = vmatpush1.msra.mxu0 0.0
    %1923 = vmatprep.subr.mxu0 0.0
    %1924 = vmatpush1.msra.mxu0 0.0
    %1925 = vmatprep.subr.mxu0 0.0
    %1926 = vmatpush1.msra.mxu0 0.0
    %1927 = vmatprep.subr.mxu0 0.0
    %1928 = vmatpush1.msra.mxu0 0.0
    %1929 = vmatprep.subr.mxu0 0.0
    %1930 = vmatpush1.msra.mxu0 0.0
    %1931 = vmatprep.subr.mxu0 0.0
    %1932 = vmatpush1.msra.mxu0 0.0
    %1933 = vmatprep.subr.mxu0 0.0
    %1934 = vmatpush1.msra.mxu0 0.0
    %1935 = vmatprep.subr.mxu0 0.0
    %1936 = vmatpush1.msra.mxu0 0.0
    %1937 = vmatprep.subr.mxu0 0.0
    %1938 = vmatpush1.msra.mxu0 0.0
    %1939 = vmatprep.subr.mxu0 0.0
    %1940 = vmatpush1.msra.mxu0 0.0
    %1941 = vmatprep.subr.mxu0 0.0
    %1942 = vmatpush1.msra.mxu0 0.0
    %1943 = vmatprep.subr.mxu0 0.0
    %1944 = vmatpush1.msra.mxu0 0.0
    %1945 = vmatprep.subr.mxu0 0.0
    %1946 = vmatpush1.msra.mxu0 0.0
    %1947 = vmatprep.subr.mxu0 0.0
    %1948 = vmatpush1.msra.mxu0 0.0
    %1949 = vmatprep.subr.mxu0 0.0
    %1950 = vmatpush1.msra.mxu0 0.0
    %1951 = vmatprep.subr.mxu0 0.0
    %1952 = vmatpush1.msra.mxu0 0.0
    %1953 = vmatprep.subr.mxu0 0.0
    %1954 = vmatpush1.msra.mxu0 0.0
    %1955 = vmatprep.subr.mxu0 0.0
    %1956 = vmatpush1.msra.mxu0 0.0
    %1957 = vmatprep.subr.mxu0 0.0
    %1958 = vmatpush1.msra.mxu0 0.0
    %1959 = vmatprep.subr.mxu0 0.0
    %1960 = vmatpush1.msra.mxu0 0.0
    %1961 = vmatprep.subr.mxu0 0.0
    %1962 = vmatpush1.msra.mxu0 0.0
    %1963 = vmatprep.subr.mxu0 0.0
    %1964 = vmatpush1.msra.mxu0 0.0
    %1965 = vmatprep.subr.mxu0 0.0
    %1966 = vmatpush1.msra.mxu0 0.0
    %1967 = vmatprep.subr.mxu0 0.0
    %1968 = vmatpush1.msra.mxu0 0.0
    %1969 = vmatprep.subr.mxu0 0.0
    %1970 = vmatpush1.msra.mxu0 0.0
    %1971 = vmatprep.subr.mxu0 0.0
    %1972 = vmatpush1.msra.mxu0 0.0
    %1973 = vmatprep.subr.mxu0 0.0
    %1974 = vmatpush1.msra.mxu0 0.0
    %1975 = vmatprep.mubr.f32.mxu0 0.0
    %1976 = vmatmul.mubr.f32.gmra.mrb[0].mxu0 %v1905
    %v1977 = vpop.f32.mrb[0].mxu0
    %v1978 = vadd.f32 0.0, %v1977
    %v1979 = vpop.f32.mrb[0].mxu0
    %1980 = vdwg.mxu0
    %1982 = vrot.lane.b32.xlu0 %v1893, 64
    %v1983 = vpop.permute.xlu0 %1982
    %v1984 = vsel %vm177, %v1983, 0
    %1986 = vmatprep.subr.mxu0 0.0
    %1987 = vmatpush1.msra.mxu0 %v1894
    %1988 = vmatprep.subr.mxu0 0.0
    %1989 = vmatpush1.msra.mxu0 %v1895
    %1990 = vmatprep.subr.mxu0 0.0
    %1991 = vmatpush1.msra.mxu0 %v1896
    %1992 = vmatprep.subr.mxu0 0.0
    %1993 = vmatpush1.msra.mxu0 %v1897
    %1994 = vmatprep.subr.mxu0 0.0
    %1995 = vmatpush1.msra.mxu0 0.0
    %1996 = vmatprep.subr.mxu0 0.0
    %1997 = vmatpush1.msra.mxu0 0.0
    %1998 = vmatprep.subr.mxu0 0.0
    %1999 = vmatpush1.msra.mxu0 0.0
    %2000 = vmatprep.subr.mxu0 0.0
    %2001 = vmatpush1.msra.mxu0 0.0
    %2002 = vmatprep.subr.mxu0 0.0
    %2003 = vmatpush1.msra.mxu0 0.0
    %2004 = vmatprep.subr.mxu0 0.0
    %2005 = vmatpush1.msra.mxu0 0.0
    %2006 = vmatprep.subr.mxu0 0.0
    %2007 = vmatpush1.msra.mxu0 0.0
    %2008 = vmatprep.subr.mxu0 0.0
    %2009 = vmatpush1.msra.mxu0 0.0
    %2010 = vmatprep.subr.mxu0 0.0
    %2011 = vmatpush1.msra.mxu0 0.0
    %2012 = vmatprep.subr.mxu0 0.0
    %2013 = vmatpush1.msra.mxu0 0.0
    %2014 = vmatprep.subr.mxu0 0.0
    %2015 = vmatpush1.msra.mxu0 0.0
    %2016 = vmatprep.subr.mxu0 0.0
    %2017 = vmatpush1.msra.mxu0 0.0
    %2018 = vmatprep.subr.mxu0 0.0
    %2019 = vmatpush1.msra.mxu0 0.0
    %2020 = vmatprep.subr.mxu0 0.0
    %2021 = vmatpush1.msra.mxu0 0.0
    %2022 = vmatprep.subr.mxu0 0.0
    %2023 = vmatpush1.msra.mxu0 0.0
    %2024 = vmatprep.subr.mxu0 0.0
    %2025 = vmatpush1.msra.mxu0 0.0
    %2026 = vmatprep.subr.mxu0 0.0
    %2027 = vmatpush1.msra.mxu0 0.0
    %2028 = vmatprep.subr.mxu0 0.0
    %2029 = vmatpush1.msra.mxu0 0.0
    %2030 = vmatprep.subr.mxu0 0.0
    %2031 = vmatpush1.msra.mxu0 0.0
    %2032 = vmatprep.subr.mxu0 0.0
    %2033 = vmatpush1.msra.mxu0 0.0
    %2034 = vmatprep.subr.mxu0 0.0
    %2035 = vmatpush1.msra.mxu0 0.0
    %2036 = vmatprep.subr.mxu0 0.0
    %2037 = vmatpush1.msra.mxu0 0.0
    %2038 = vmatprep.subr.mxu0 0.0
    %2039 = vmatpush1.msra.mxu0 0.0
    %2040 = vmatprep.subr.mxu0 0.0
    %2041 = vmatpush1.msra.mxu0 0.0
    %2042 = vmatprep.subr.mxu0 0.0
    %2043 = vmatpush1.msra.mxu0 0.0
    %2044 = vmatprep.subr.mxu0 0.0
    %2045 = vmatpush1.msra.mxu0 0.0
    %2046 = vmatprep.subr.mxu0 0.0
    %2047 = vmatpush1.msra.mxu0 0.0
    %2048 = vmatprep.subr.mxu0 0.0
    %2049 = vmatpush1.msra.mxu0 0.0
    %2050 = vmatprep.mubr.f32.mxu0 0.0
    %2051 = vmatmul.mubr.f32.gmra.mrb[0].mxu0 %v1984
    %v2052 = vpop.f32.mrb[0].mxu0
    %v2053 = vadd.f32 %v1978, %v2052
    %v2054 = vpop.f32.mrb[0].mxu0
    %2055 = vdwg.mxu0
    %v2056 = vlaneseq
    %v2057 = vshrl.u32 %v2056, 7
    %v2058 = vsub.s32 0, %v2057
    %v2059 = vrot.slane %v1899, %v2058
    %v2060 = vadd.f32 %v2053, %v2059
    %v2061 = vmax.f32 %v2060, 0.0
    %v2062 = vlaneseq
    %v2063 = vshrl.u32 %v2062, 7
    %v2064 = vsub.s32 0, %v2063
    %v2065 = vrot.slane %v1900, %v2064
    %v2066 = vmul.f32 %v2061, %v2065
    %2067 = vadd.xlane.f32.xlu0 %v2066
    %v2068 = vpop.xlane.xlu0 %2067
    %v2069 = vlaneseq
    %v2070 = vshrl.u32 %v2069, 7
    %v2071 = vsub.s32 0, %v2070
    %v2072 = vrot.slane %v1901, %v2071
    %v2073 = vadd.f32 %v2068, %v2072
    %vm2074 = vcmask 7168
    %2075 = vst.msk [vmem:[%s3] sm:$0xff] %vm2074, %v2073
    // Predicated region
    $region18: #{lstm_classifier_v2_forward.1} parent=1 // pred_check
      _
    $region19: #{lstm_classifier_v2_forward.1} parent=1 // pred_check_branch
      %2077 = sbr.rel (0) target = $region21
    $region20: #{lstm_classifier_v2_forward.1} parent=1 // pred_region
      _
    $region21: #{lstm_classifier_v2_forward.1} parent=1 // pred_fallthru
      _
    // Predicated region
    $region22: #{lstm_classifier_v2_forward.1} parent=1 // pred_check
      _
    $region23: #{lstm_classifier_v2_forward.1} parent=1 // pred_check_branch
      %2079 = sbr.rel (0) target = $region25
    $region24: #{lstm_classifier_v2_forward.1} parent=1 // pred_region
      _
    $region25: #{lstm_classifier_v2_forward.1} parent=1 // pred_fallthru
      _
    %2080 = vsyncpa [#allocation3], 1

</llo_original>
